<compile_context>
chip_gen: v6e
topology: v6e:2x2x1
jax: 0.10.0
libtpu: 0.0.40
codegen_flags: <defaults>
</compile_context>

<pallas_src>
import functools

import numpy as np
import jax
import jax.numpy as jnp
from jax import lax
from jax.experimental import pallas as pl
from jax.experimental.pallas import tpu as pltpu


def _round_up(x, m):
    return (x + m - 1) // m * m


# ----------------------------------------------------------------------------
# Pallas GRU kernel (single layer, unidirectional, PyTorch nn.GRU gate math)
# ----------------------------------------------------------------------------
def _gru_kernel(gx_ref, len_ref, whh_ref, bhh_ref, out_ref, h_ref, *,
                t_block, gate_w):
    """One grid step advances the recurrence by `t_block` timesteps.

    gx_ref : (t_block, Bp, 3*gate_w)  precomputed x @ W_ih + b_ih (hoisted)
    len_ref: (Bp, 1) int32            per-row sequence lengths
    whh_ref: (gate_w, 3*gate_w)       fused recurrent weight (r|z|n), resident
    bhh_ref: (1, 3*gate_w)            fused recurrent bias
    out_ref: (t_block, Bp, gate_w)    per-step outputs (zero past length)
    h_ref  : (Bp, gate_w)             VMEM-resident hidden state / final hidden
    """
    tblk = pl.program_id(0)

    @pl.when(tblk == 0)
    def _():
        h_ref[...] = jnp.zeros_like(h_ref)

    whh = whh_ref[...]
    bhh = bhh_ref[...]
    lens = len_ref[...]
    t0 = tblk * t_block

    def step(i, h):
        gx = gx_ref[i]                                           # (Bp, 3G)
        # Single fused recurrent matmul for all three gates.
        gh = jnp.dot(h, whh, preferred_element_type=jnp.float32) + bhh
        r = jax.nn.sigmoid(gx[:, :gate_w] + gh[:, :gate_w])
        z = jax.nn.sigmoid(gx[:, gate_w:2 * gate_w] + gh[:, gate_w:2 * gate_w])
        n = jnp.tanh(gx[:, 2 * gate_w:] + r * gh[:, 2 * gate_w:])
        h_new = (1.0 - z) * n + z * h
        mask = lens > (t0 + i)                                   # (Bp, 1) bool
        out_ref[i] = jnp.where(mask, h_new, 0.0)                 # zero past length
        return jnp.where(mask, h_new, h)                         # freeze past length

    h_ref[...] = lax.fori_loop(0, t_block, step, h_ref[...], unroll=True)


def gru_pallas(x, lengths, wih, whh, bih, bhh, *, t_block=8):
    """x: (T, B, E) f32, lengths: (B,) int32.

    wih: (3, E, H), whh: (3, H, H), bih/bhh: (3, 1, H)  (PyTorch r,z,n order)
    Returns (outputs (T, B, H), h_final (B, H)).
    """
    T, B, E = x.shape
    H = wih.shape[-1]
    Hp = _round_up(H, 128)          # lane-dense gate width
    Bp = _round_up(B, 8)            # sublane-aligned batch
    Tp = _round_up(T, t_block)

    # Fused + lane-padded weights; gate g occupies lanes [g*Hp, g*Hp+H).
    wih_f = jnp.zeros((E, 3 * Hp), jnp.float32)
    bih_f = jnp.zeros((1, 3 * Hp), jnp.float32)
    whh_f = jnp.zeros((Hp, 3 * Hp), jnp.float32)
    bhh_f = jnp.zeros((1, 3 * Hp), jnp.float32)
    for g in range(3):
        wih_f = wih_f.at[:, g * Hp:g * Hp + H].set(wih[g])
        bih_f = bih_f.at[:, g * Hp:g * Hp + H].set(bih[g, 0])
        whh_f = whh_f.at[:H, g * Hp:g * Hp + H].set(whh[g])
        bhh_f = bhh_f.at[:, g * Hp:g * Hp + H].set(bhh[g, 0])

    # Hoisted input projection: one MXU-friendly (T*B, E) x (E, 3*Hp) matmul.
    gx = jnp.dot(x.reshape(T * B, E).astype(jnp.float32), wih_f,
                 preferred_element_type=jnp.float32) + bih_f
    gx = gx.reshape(T, B, 3 * Hp)
    gx = jnp.pad(gx, ((0, Tp - T), (0, Bp - B), (0, 0)))

    len_p = jnp.zeros((Bp, 1), jnp.int32).at[:B, 0].set(lengths.astype(jnp.int32))

    kernel = functools.partial(_gru_kernel, t_block=t_block, gate_w=Hp)
    out, h_final = pl.pallas_call(
        kernel,
        out_shape=(jax.ShapeDtypeStruct((Tp, Bp, Hp), jnp.float32),
                   jax.ShapeDtypeStruct((Bp, Hp), jnp.float32)),
        grid_spec=pltpu.PrefetchScalarGridSpec(
            num_scalar_prefetch=0,
            grid=(Tp // t_block,),
            in_specs=[
                pl.BlockSpec((t_block, Bp, 3 * Hp), lambda t: (t, 0, 0)),  # gx slab
                pl.BlockSpec((Bp, 1), lambda t: (0, 0)),                   # lengths
                pl.BlockSpec((Hp, 3 * Hp), lambda t: (0, 0)),              # fused W_hh
                pl.BlockSpec((1, 3 * Hp), lambda t: (0, 0)),               # fused b_hh
            ],
            out_specs=[
                pl.BlockSpec((t_block, Bp, Hp), lambda t: (t, 0, 0)),      # outputs
                pl.BlockSpec((Bp, Hp), lambda t: (0, 0)),                  # resident h
            ]),
        compiler_params=pltpu.CompilerParams(
            dimension_semantics=("arbitrary",)),     # time axis is sequential
    )(gx, len_p, whh_f, bhh_f)
    # TODO(synk): on v7x a leading "parallel" batch-grid axis (or core_map over
    # the two independent GRU passes) would use the second TensorCore.
    return out[:T, :B, :H], h_final[:B, :H]


# ----------------------------------------------------------------------------
# Pure-JAX reference GRU (for correctness checking only)
# ----------------------------------------------------------------------------
def gru_ref(x, lengths, wih, whh, bih, bhh):
    T, B, _ = x.shape
    H = wih.shape[-1]
    h0 = jnp.zeros((B, H), jnp.float32)

    def step(h, inp):
        xt, t = inp
        gx = [xt @ wih[g] + bih[g] for g in range(3)]
        gh = [h @ whh[g] + bhh[g] for g in range(3)]
        r = jax.nn.sigmoid(gx[0] + gh[0])
        z = jax.nn.sigmoid(gx[1] + gh[1])
        n = jnp.tanh(gx[2] + r * gh[2])
        h_new = (1.0 - z) * n + z * h
        mask = (lengths[:, None] > t).astype(jnp.float32)
        return mask * h_new + (1.0 - mask) * h, mask * h_new

    hT, outs = lax.scan(step, h0, (x.astype(jnp.float32), jnp.arange(T)))
    return outs, hT


# ----------------------------------------------------------------------------
# ADEM forward (glue in plain JAX, vectorized; recurrences run in the kernel)
# ----------------------------------------------------------------------------
def adem_forward(gru_fn, embedding, enc_params, ctx_params,
                 sentences, sentence_length, input_conversation_length,
                 target_sentences=None):
    """input_conversation_length is a Python list (static lengths), matching the
    per-example Python loops in the PyTorch forward."""
    conv_len = [int(l) for l in input_conversation_length]
    batch_size = len(conv_len)
    num_sentences = sentences.shape[0] - batch_size
    max_len = max(conv_len)

    # ---- word-level EncoderRNN ----
    emb = jnp.take(embedding, sentences, axis=0)                 # (N, S, E)
    x = jnp.transpose(emb, (1, 0, 2)).astype(jnp.float32)        # (S, N, E)
    _enc_out, enc_hidden = gru_fn(x, sentence_length.astype(jnp.int32), *enc_params)
    assert enc_hidden.shape[0] == num_sentences + batch_size

    # ---- start = cumsum([0] + (conv_len[:-1] + 1)); pad & stack via one gather ----
    starts = np.concatenate(
        [[0], np.cumsum(np.asarray(conv_len[:-1], np.int64) + 1)]).astype(np.int32)
    pos = np.arange(max_len + 1)[None, :]                         # (1, max_len+1)
    gather_idx = np.minimum(starts[:, None] + pos, enc_hidden.shape[0] - 1)
    valid = (pos <= np.asarray(conv_len)[:, None]).astype(np.float32)
    encoder_hidden = jnp.take(enc_hidden, jnp.asarray(gather_idx), axis=0)
    encoder_hidden = encoder_hidden * jnp.asarray(valid)[:, :, None]  # (B, max_len+1, H)

    encoder_hidden_inference = encoder_hidden[:, 1:, :]          # (B, max_len, H)
    encoder_hidden_input = encoder_hidden[:, :-1, :]             # (B, max_len, H)

    # flat row indices [i*max_len + j for j < conv_len[i]] (single gather)
    flat_rows = jnp.asarray(np.concatenate(
        [i * max_len + np.arange(l) for i, l in enumerate(conv_len)]).astype(np.int32))
    encoder_hidden_inference_flat = jnp.take(
        encoder_hidden_inference.reshape(batch_size * max_len, -1), flat_rows, axis=0)

    # ---- sentence-level ContextRNN ----
    ctx_x = jnp.transpose(encoder_hidden_input, (1, 0, 2))       # (max_len, B, H)
    ctx_lengths = jnp.asarray(conv_len, jnp.int32)
    ctx_out, _ctx_hidden = gru_fn(ctx_x, ctx_lengths, *ctx_params)
    context_outputs = jnp.transpose(ctx_out, (1, 0, 2))          # (B, max_len, C)
    context_outputs_flat = jnp.take(
        context_outputs.reshape(batch_size * max_len, -1), flat_rows, axis=0)

    # TODO(synk): the PyTorch forward literally returns None; we return the
    # computed flats so the kernel work is observable/verifiable.
    return encoder_hidden_inference_flat, context_outputs_flat


# ----------------------------------------------------------------------------
# Deterministic parameter init (shapes from the module's __init__)
# ----------------------------------------------------------------------------
def init_gru_params(key, in_dim, hidden):
    bound = 1.0 / float(hidden) ** 0.5
    k0, k1, k2, k3 = jax.random.split(key, 4)
    wih = jax.random.uniform(k0, (3, in_dim, hidden), jnp.float32, -bound, bound)
    whh = jax.random.uniform(k1, (3, hidden, hidden), jnp.float32, -bound, bound)
    bih = jax.random.uniform(k2, (3, 1, hidden), jnp.float32, -bound, bound)
    bhh = jax.random.uniform(k3, (3, 1, hidden), jnp.float32, -bound, bound)
    return wih, whh, bih, bhh


if __name__ == "__main__":
    key = jax.random.PRNGKey(0)
    vocab_size, embed_size = 100, 16
    hidden_size, context_size = 32, 32       # context_input_size = 1*hidden*1 = 32
    seq_len = 8
    input_conversation_length = [3, 2]       # per-conversation context lengths
    batch_size = len(input_conversation_length)
    num_sentences = sum(input_conversation_length)
    total_sent = num_sentences + batch_size  # 7

    k_emb, k_enc, k_ctx, k_sent, k_len, k_tgt = jax.random.split(key, 6)
    embedding = 0.1 * jax.random.normal(k_emb, (vocab_size, embed_size), jnp.float32)
    enc_params = init_gru_params(k_enc, embed_size, hidden_size)
    ctx_params = init_gru_params(k_ctx, hidden_size, context_size)

    sentences = jax.random.randint(k_sent, (total_sent, seq_len), 1, vocab_size, jnp.int32)
    sentence_length = jax.random.randint(k_len, (total_sent,), 2, seq_len + 1, jnp.int32)
    target_sentences = jax.random.randint(k_tgt, (num_sentences, seq_len), 1, vocab_size, jnp.int32)

    # Pallas-kernel forward
    ehi_flat, ctx_flat = adem_forward(
        gru_pallas, embedding, enc_params, ctx_params,
        sentences, sentence_length, input_conversation_length, target_sentences)
    jax.block_until_ready((ehi_flat, ctx_flat))

    # Pure-JAX reference of the same forward, for a numerical sanity check
    ehi_ref, ctx_ref = adem_forward(
        gru_ref, embedding, enc_params, ctx_params,
        sentences, sentence_length, input_conversation_length, target_sentences)
    jax.block_until_ready((ehi_ref, ctx_ref))

    assert ehi_flat.shape == (num_sentences, hidden_size)
    assert ctx_flat.shape == (num_sentences, context_size)
    assert jnp.allclose(ehi_flat, ehi_ref, atol=2e-3, rtol=2e-3)
    assert jnp.allclose(ctx_flat, ctx_ref, atol=2e-3, rtol=2e-3)

    print("KERNEL_OK")
</pallas_src>

<mosaic_0001>
module attributes {stable_mosaic.version = 11 : i64} {
  func.func @_gru_kernel(%arg0: i32, %arg1: memref<8x8x384xf32, #tpu.memory_space<vmem>>, %arg2: memref<8x1xi32, #tpu.memory_space<vmem>>, %arg3: memref<128x384xf32, #tpu.memory_space<vmem>>, %arg4: memref<1x384xf32, #tpu.memory_space<vmem>>, %arg5: memref<8x8x128xf32, #tpu.memory_space<vmem>>, %arg6: memref<8x128xf32, #tpu.memory_space<vmem>>) attributes {dimension_semantics = [#tpu.dimension_semantics<arbitrary>], iteration_bounds = array<i64: 1>, scalar_prefetch = 0 : i64, scratch_operands = 0 : i64, tpu.core_type = #tpu.core_type<tc>, window_params = [{transform_indices = @transform_0, window_bounds = array<i64: 8, 8, 384>}, {pipeline_mode = #tpu.pipeline_mode<synchronous>, transform_indices = @transform_1, window_bounds = array<i64: 8, 1>}, {pipeline_mode = #tpu.pipeline_mode<synchronous>, transform_indices = @transform_2, window_bounds = array<i64: 128, 384>}, {pipeline_mode = #tpu.pipeline_mode<synchronous>, transform_indices = @transform_3, window_bounds = array<i64: 1, 384>}, {transform_indices = @transform_4, window_bounds = array<i64: 8, 8, 128>}, {pipeline_mode = #tpu.pipeline_mode<synchronous>, transform_indices = @transform_5, window_bounds = array<i64: 8, 128>}]} {
    %c0_i32 = arith.constant 0 : i32
    %0 = arith.cmpi eq, %arg0, %c0_i32 : i32
    %1 = arith.extui %0 : i1 to i32
    %c0_i32_0 = arith.constant 0 : i32
    %2 = arith.cmpi ne, %1, %c0_i32_0 : i32
    scf.if %2 {
      %cst_83 = arith.constant 0.000000e+00 : f32
      %377 = vector.broadcast %cst_83 : f32 to vector<8x128xf32>
      %c0_84 = arith.constant 0 : index
      %c0_85 = arith.constant 0 : index
      %378 = vector.load %arg6[%c0_84, %c0_85] : memref<8x128xf32, #tpu.memory_space<vmem>>, vector<8x128xf32>
      tpu.vector_store %arg6[%c0_84, %c0_85], %377 {strides = array<i32>} : memref<8x128xf32, #tpu.memory_space<vmem>>, vector<8x128xf32>,
    } else {
    }
    %c0 = arith.constant 0 : index
    %c0_1 = arith.constant 0 : index
    %3 = vector.load %arg3[%c0, %c0_1] : memref<128x384xf32, #tpu.memory_space<vmem>>, vector<128x384xf32>
    %c0_2 = arith.constant 0 : index
    %c0_3 = arith.constant 0 : index
    %4 = vector.load %arg4[%c0_2, %c0_3] : memref<1x384xf32, #tpu.memory_space<vmem>>, vector<1x384xf32>
    %c0_4 = arith.constant 0 : index
    %c0_5 = arith.constant 0 : index
    %5 = vector.load %arg2[%c0_4, %c0_5] : memref<8x1xi32, #tpu.memory_space<vmem>>, vector<8x1xi32>
    %c8_i32 = arith.constant 8 : i32
    %6 = arith.muli %arg0, %c8_i32 : i32
    %c0_6 = arith.constant 0 : index
    %c0_7 = arith.constant 0 : index
    %7 = vector.load %arg6[%c0_6, %c0_7] : memref<8x128xf32, #tpu.memory_space<vmem>>, vector<8x128xf32>
    %c0_i32_8 = arith.constant 0 : i32
    %8 = arith.index_cast %c0_i32_8 : i32 to index
    %c0_9 = arith.constant 0 : index
    %c0_10 = arith.constant 0 : index
    %9 = vector.load %arg1[%8, %c0_9, %c0_10] : memref<8x8x384xf32, #tpu.memory_space<vmem>>, vector<1x8x384xf32>
    %10 = vector.shape_cast %9 : vector<1x8x384xf32> to vector<8x384xf32>
    %cst = arith.constant dense<0.000000e+00> : vector<8x384xf32>
    %11 = tpu.matmul %7, %3, %cst {dimension_numbers = #tpu.dot_dimension_numbers<[1], [0], [0], [1], [0, 0, 1, 1], [], []>} : vector<8x128xf32>, vector<128x384xf32>, vector<8x384xf32> -> vector<8x384xf32>
    %12 = vector.broadcast %4 : vector<1x384xf32> to vector<8x384xf32>
    %13 = arith.addf %11, %12 : vector<8x384xf32>
    %14 = vector.extract_strided_slice %10 {offsets = [0, 0], sizes = [8, 128], strides = [1, 1]} : vector<8x384xf32> to vector<8x128xf32>
    %15 = vector.extract_strided_slice %13 {offsets = [0, 0], sizes = [8, 128], strides = [1, 1]} : vector<8x384xf32> to vector<8x128xf32>
    %16 = arith.addf %14, %15 : vector<8x128xf32>
    %17 = arith.negf %16 : vector<8x128xf32>
    %18 = math.exp %17 : vector<8x128xf32>
    %cst_11 = arith.constant 1.000000e+00 : f32
    %19 = vector.broadcast %cst_11 : f32 to vector<8x128xf32>
    %20 = arith.addf %19, %18 : vector<8x128xf32>
    %21 = arith.divf %19, %20 : vector<8x128xf32>
    %22 = vector.extract_strided_slice %10 {offsets = [0, 128], sizes = [8, 128], strides = [1, 1]} : vector<8x384xf32> to vector<8x128xf32>
    %23 = vector.extract_strided_slice %13 {offsets = [0, 128], sizes = [8, 128], strides = [1, 1]} : vector<8x384xf32> to vector<8x128xf32>
    %24 = arith.addf %22, %23 : vector<8x128xf32>
    %25 = arith.negf %24 : vector<8x128xf32>
    %26 = math.exp %25 : vector<8x128xf32>
    %cst_12 = arith.constant 1.000000e+00 : f32
    %27 = vector.broadcast %cst_12 : f32 to vector<8x128xf32>
    %28 = arith.addf %27, %26 : vector<8x128xf32>
    %29 = arith.divf %27, %28 : vector<8x128xf32>
    %30 = vector.extract_strided_slice %10 {offsets = [0, 256], sizes = [8, 128], strides = [1, 1]} : vector<8x384xf32> to vector<8x128xf32>
    %31 = vector.extract_strided_slice %13 {offsets = [0, 256], sizes = [8, 128], strides = [1, 1]} : vector<8x384xf32> to vector<8x128xf32>
    %32 = arith.mulf %21, %31 : vector<8x128xf32>
    %33 = arith.addf %30, %32 : vector<8x128xf32>
    %34 = math.tanh %33 : vector<8x128xf32>
    %cst_13 = arith.constant 1.000000e+00 : f32
    %35 = vector.broadcast %cst_13 : f32 to vector<8x128xf32>
    %36 = arith.subf %35, %29 : vector<8x128xf32>
    %37 = arith.mulf %36, %34 : vector<8x128xf32>
    %38 = arith.mulf %29, %7 : vector<8x128xf32>
    %39 = arith.addf %37, %38 : vector<8x128xf32>
    %40 = arith.addi %6, %c0_i32_8 : i32
    %41 = vector.broadcast %40 : i32 to vector<8x1xi32>
    %42 = arith.cmpi sgt, %5, %41 : vector<8x1xi32>
    %cst_14 = arith.constant 0.000000e+00 : f32
    %43 = vector.shape_cast %42 : vector<8x1xi1> to vector<8x1xi1>
    %44 = vector.broadcast %43 : vector<8x1xi1> to vector<8x128xi1>
    %45 = vector.broadcast %cst_14 : f32 to vector<8x128xf32>
    %46 = arith.select %44, %39, %45 : vector<8x128xi1>, vector<8x128xf32>
    %47 = arith.index_cast %c0_i32_8 : i32 to index
    %c0_15 = arith.constant 0 : index
    %c0_16 = arith.constant 0 : index
    %48 = vector.load %arg5[%47, %c0_15, %c0_16] : memref<8x8x128xf32, #tpu.memory_space<vmem>>, vector<1x8x128xf32>
    %49 = vector.shape_cast %48 : vector<1x8x128xf32> to vector<8x128xf32>
    %50 = vector.shape_cast %46 : vector<8x128xf32> to vector<1x8x128xf32>
    tpu.vector_store %arg5[%47, %c0_15, %c0_16], %50 {strides = array<i32>} : memref<8x8x128xf32, #tpu.memory_space<vmem>>, vector<1x8x128xf32>,
    %51 = vector.shape_cast %42 : vector<8x1xi1> to vector<8x1xi1>
    %52 = vector.broadcast %51 : vector<8x1xi1> to vector<8x128xi1>
    %53 = arith.select %52, %39, %7 : vector<8x128xi1>, vector<8x128xf32>
    %c1_i32 = arith.constant 1 : i32
    %54 = arith.index_cast %c1_i32 : i32 to index
    %c0_17 = arith.constant 0 : index
    %c0_18 = arith.constant 0 : index
    %55 = vector.load %arg1[%54, %c0_17, %c0_18] : memref<8x8x384xf32, #tpu.memory_space<vmem>>, vector<1x8x384xf32>
    %56 = vector.shape_cast %55 : vector<1x8x384xf32> to vector<8x384xf32>
    %cst_19 = arith.constant dense<0.000000e+00> : vector<8x384xf32>
    %57 = tpu.matmul %53, %3, %cst_19 {dimension_numbers = #tpu.dot_dimension_numbers<[1], [0], [0], [1], [0, 0, 1, 1], [], []>} : vector<8x128xf32>, vector<128x384xf32>, vector<8x384xf32> -> vector<8x384xf32>
    %58 = vector.broadcast %4 : vector<1x384xf32> to vector<8x384xf32>
    %59 = arith.addf %57, %58 : vector<8x384xf32>
    %60 = vector.extract_strided_slice %56 {offsets = [0, 0], sizes = [8, 128], strides = [1, 1]} : vector<8x384xf32> to vector<8x128xf32>
    %61 = vector.extract_strided_slice %59 {offsets = [0, 0], sizes = [8, 128], strides = [1, 1]} : vector<8x384xf32> to vector<8x128xf32>
    %62 = arith.addf %60, %61 : vector<8x128xf32>
    %63 = arith.negf %62 : vector<8x128xf32>
    %64 = math.exp %63 : vector<8x128xf32>
    %cst_20 = arith.constant 1.000000e+00 : f32
    %65 = vector.broadcast %cst_20 : f32 to vector<8x128xf32>
    %66 = arith.addf %65, %64 : vector<8x128xf32>
    %67 = arith.divf %65, %66 : vector<8x128xf32>
    %68 = vector.extract_strided_slice %56 {offsets = [0, 128], sizes = [8, 128], strides = [1, 1]} : vector<8x384xf32> to vector<8x128xf32>
    %69 = vector.extract_strided_slice %59 {offsets = [0, 128], sizes = [8, 128], strides = [1, 1]} : vector<8x384xf32> to vector<8x128xf32>
    %70 = arith.addf %68, %69 : vector<8x128xf32>
    %71 = arith.negf %70 : vector<8x128xf32>
    %72 = math.exp %71 : vector<8x128xf32>
    %cst_21 = arith.constant 1.000000e+00 : f32
    %73 = vector.broadcast %cst_21 : f32 to vector<8x128xf32>
    %74 = arith.addf %73, %72 : vector<8x128xf32>
    %75 = arith.divf %73, %74 : vector<8x128xf32>
    %76 = vector.extract_strided_slice %56 {offsets = [0, 256], sizes = [8, 128], strides = [1, 1]} : vector<8x384xf32> to vector<8x128xf32>
    %77 = vector.extract_strided_slice %59 {offsets = [0, 256], sizes = [8, 128], strides = [1, 1]} : vector<8x384xf32> to vector<8x128xf32>
    %78 = arith.mulf %67, %77 : vector<8x128xf32>
    %79 = arith.addf %76, %78 : vector<8x128xf32>
    %80 = math.tanh %79 : vector<8x128xf32>
    %cst_22 = arith.constant 1.000000e+00 : f32
    %81 = vector.broadcast %cst_22 : f32 to vector<8x128xf32>
    %82 = arith.subf %81, %75 : vector<8x128xf32>
    %83 = arith.mulf %82, %80 : vector<8x128xf32>
    %84 = arith.mulf %75, %53 : vector<8x128xf32>
    %85 = arith.addf %83, %84 : vector<8x128xf32>
    %86 = arith.addi %6, %c1_i32 : i32
    %87 = vector.broadcast %86 : i32 to vector<8x1xi32>
    %88 = arith.cmpi sgt, %5, %87 : vector<8x1xi32>
    %cst_23 = arith.constant 0.000000e+00 : f32
    %89 = vector.shape_cast %88 : vector<8x1xi1> to vector<8x1xi1>
    %90 = vector.broadcast %89 : vector<8x1xi1> to vector<8x128xi1>
    %91 = vector.broadcast %cst_23 : f32 to vector<8x128xf32>
    %92 = arith.select %90, %85, %91 : vector<8x128xi1>, vector<8x128xf32>
    %93 = arith.index_cast %c1_i32 : i32 to index
    %c0_24 = arith.constant 0 : index
    %c0_25 = arith.constant 0 : index
    %94 = vector.load %arg5[%93, %c0_24, %c0_25] : memref<8x8x128xf32, #tpu.memory_space<vmem>>, vector<1x8x128xf32>
    %95 = vector.shape_cast %94 : vector<1x8x128xf32> to vector<8x128xf32>
    %96 = vector.shape_cast %92 : vector<8x128xf32> to vector<1x8x128xf32>
    tpu.vector_store %arg5[%93, %c0_24, %c0_25], %96 {strides = array<i32>} : memref<8x8x128xf32, #tpu.memory_space<vmem>>, vector<1x8x128xf32>,
    %97 = vector.shape_cast %88 : vector<8x1xi1> to vector<8x1xi1>
    %98 = vector.broadcast %97 : vector<8x1xi1> to vector<8x128xi1>
    %99 = arith.select %98, %85, %53 : vector<8x128xi1>, vector<8x128xf32>
    %c2_i32 = arith.constant 2 : i32
    %100 = arith.index_cast %c2_i32 : i32 to index
    %c0_26 = arith.constant 0 : index
    %c0_27 = arith.constant 0 : index
    %101 = vector.load %arg1[%100, %c0_26, %c0_27] : memref<8x8x384xf32, #tpu.memory_space<vmem>>, vector<1x8x384xf32>
    %102 = vector.shape_cast %101 : vector<1x8x384xf32> to vector<8x384xf32>
    %cst_28 = arith.constant dense<0.000000e+00> : vector<8x384xf32>
    %103 = tpu.matmul %99, %3, %cst_28 {dimension_numbers = #tpu.dot_dimension_numbers<[1], [0], [0], [1], [0, 0, 1, 1], [], []>} : vector<8x128xf32>, vector<128x384xf32>, vector<8x384xf32> -> vector<8x384xf32>
    %104 = vector.broadcast %4 : vector<1x384xf32> to vector<8x384xf32>
    %105 = arith.addf %103, %104 : vector<8x384xf32>
    %106 = vector.extract_strided_slice %102 {offsets = [0, 0], sizes = [8, 128], strides = [1, 1]} : vector<8x384xf32> to vector<8x128xf32>
    %107 = vector.extract_strided_slice %105 {offsets = [0, 0], sizes = [8, 128], strides = [1, 1]} : vector<8x384xf32> to vector<8x128xf32>
    %108 = arith.addf %106, %107 : vector<8x128xf32>
    %109 = arith.negf %108 : vector<8x128xf32>
    %110 = math.exp %109 : vector<8x128xf32>
    %cst_29 = arith.constant 1.000000e+00 : f32
    %111 = vector.broadcast %cst_29 : f32 to vector<8x128xf32>
    %112 = arith.addf %111, %110 : vector<8x128xf32>
    %113 = arith.divf %111, %112 : vector<8x128xf32>
    %114 = vector.extract_strided_slice %102 {offsets = [0, 128], sizes = [8, 128], strides = [1, 1]} : vector<8x384xf32> to vector<8x128xf32>
    %115 = vector.extract_strided_slice %105 {offsets = [0, 128], sizes = [8, 128], strides = [1, 1]} : vector<8x384xf32> to vector<8x128xf32>
    %116 = arith.addf %114, %115 : vector<8x128xf32>
    %117 = arith.negf %116 : vector<8x128xf32>
    %118 = math.exp %117 : vector<8x128xf32>
    %cst_30 = arith.constant 1.000000e+00 : f32
    %119 = vector.broadcast %cst_30 : f32 to vector<8x128xf32>
    %120 = arith.addf %119, %118 : vector<8x128xf32>
    %121 = arith.divf %119, %120 : vector<8x128xf32>
    %122 = vector.extract_strided_slice %102 {offsets = [0, 256], sizes = [8, 128], strides = [1, 1]} : vector<8x384xf32> to vector<8x128xf32>
    %123 = vector.extract_strided_slice %105 {offsets = [0, 256], sizes = [8, 128], strides = [1, 1]} : vector<8x384xf32> to vector<8x128xf32>
    %124 = arith.mulf %113, %123 : vector<8x128xf32>
    %125 = arith.addf %122, %124 : vector<8x128xf32>
    %126 = math.tanh %125 : vector<8x128xf32>
    %cst_31 = arith.constant 1.000000e+00 : f32
    %127 = vector.broadcast %cst_31 : f32 to vector<8x128xf32>
    %128 = arith.subf %127, %121 : vector<8x128xf32>
    %129 = arith.mulf %128, %126 : vector<8x128xf32>
    %130 = arith.mulf %121, %99 : vector<8x128xf32>
    %131 = arith.addf %129, %130 : vector<8x128xf32>
    %132 = arith.addi %6, %c2_i32 : i32
    %133 = vector.broadcast %132 : i32 to vector<8x1xi32>
    %134 = arith.cmpi sgt, %5, %133 : vector<8x1xi32>
    %cst_32 = arith.constant 0.000000e+00 : f32
    %135 = vector.shape_cast %134 : vector<8x1xi1> to vector<8x1xi1>
    %136 = vector.broadcast %135 : vector<8x1xi1> to vector<8x128xi1>
    %137 = vector.broadcast %cst_32 : f32 to vector<8x128xf32>
    %138 = arith.select %136, %131, %137 : vector<8x128xi1>, vector<8x128xf32>
    %139 = arith.index_cast %c2_i32 : i32 to index
    %c0_33 = arith.constant 0 : index
    %c0_34 = arith.constant 0 : index
    %140 = vector.load %arg5[%139, %c0_33, %c0_34] : memref<8x8x128xf32, #tpu.memory_space<vmem>>, vector<1x8x128xf32>
    %141 = vector.shape_cast %140 : vector<1x8x128xf32> to vector<8x128xf32>
    %142 = vector.shape_cast %138 : vector<8x128xf32> to vector<1x8x128xf32>
    tpu.vector_store %arg5[%139, %c0_33, %c0_34], %142 {strides = array<i32>} : memref<8x8x128xf32, #tpu.memory_space<vmem>>, vector<1x8x128xf32>,
    %143 = vector.shape_cast %134 : vector<8x1xi1> to vector<8x1xi1>
    %144 = vector.broadcast %143 : vector<8x1xi1> to vector<8x128xi1>
    %145 = arith.select %144, %131, %99 : vector<8x128xi1>, vector<8x128xf32>
    %c3_i32 = arith.constant 3 : i32
    %146 = arith.index_cast %c3_i32 : i32 to index
    %c0_35 = arith.constant 0 : index
    %c0_36 = arith.constant 0 : index
    %147 = vector.load %arg1[%146, %c0_35, %c0_36] : memref<8x8x384xf32, #tpu.memory_space<vmem>>, vector<1x8x384xf32>
    %148 = vector.shape_cast %147 : vector<1x8x384xf32> to vector<8x384xf32>
    %cst_37 = arith.constant dense<0.000000e+00> : vector<8x384xf32>
    %149 = tpu.matmul %145, %3, %cst_37 {dimension_numbers = #tpu.dot_dimension_numbers<[1], [0], [0], [1], [0, 0, 1, 1], [], []>} : vector<8x128xf32>, vector<128x384xf32>, vector<8x384xf32> -> vector<8x384xf32>
    %150 = vector.broadcast %4 : vector<1x384xf32> to vector<8x384xf32>
    %151 = arith.addf %149, %150 : vector<8x384xf32>
    %152 = vector.extract_strided_slice %148 {offsets = [0, 0], sizes = [8, 128], strides = [1, 1]} : vector<8x384xf32> to vector<8x128xf32>
    %153 = vector.extract_strided_slice %151 {offsets = [0, 0], sizes = [8, 128], strides = [1, 1]} : vector<8x384xf32> to vector<8x128xf32>
    %154 = arith.addf %152, %153 : vector<8x128xf32>
    %155 = arith.negf %154 : vector<8x128xf32>
    %156 = math.exp %155 : vector<8x128xf32>
    %cst_38 = arith.constant 1.000000e+00 : f32
    %157 = vector.broadcast %cst_38 : f32 to vector<8x128xf32>
    %158 = arith.addf %157, %156 : vector<8x128xf32>
    %159 = arith.divf %157, %158 : vector<8x128xf32>
    %160 = vector.extract_strided_slice %148 {offsets = [0, 128], sizes = [8, 128], strides = [1, 1]} : vector<8x384xf32> to vector<8x128xf32>
    %161 = vector.extract_strided_slice %151 {offsets = [0, 128], sizes = [8, 128], strides = [1, 1]} : vector<8x384xf32> to vector<8x128xf32>
    %162 = arith.addf %160, %161 : vector<8x128xf32>
    %163 = arith.negf %162 : vector<8x128xf32>
    %164 = math.exp %163 : vector<8x128xf32>
    %cst_39 = arith.constant 1.000000e+00 : f32
    %165 = vector.broadcast %cst_39 : f32 to vector<8x128xf32>
    %166 = arith.addf %165, %164 : vector<8x128xf32>
    %167 = arith.divf %165, %166 : vector<8x128xf32>
    %168 = vector.extract_strided_slice %148 {offsets = [0, 256], sizes = [8, 128], strides = [1, 1]} : vector<8x384xf32> to vector<8x128xf32>
    %169 = vector.extract_strided_slice %151 {offsets = [0, 256], sizes = [8, 128], strides = [1, 1]} : vector<8x384xf32> to vector<8x128xf32>
    %170 = arith.mulf %159, %169 : vector<8x128xf32>
    %171 = arith.addf %168, %170 : vector<8x128xf32>
    %172 = math.tanh %171 : vector<8x128xf32>
    %cst_40 = arith.constant 1.000000e+00 : f32
    %173 = vector.broadcast %cst_40 : f32 to vector<8x128xf32>
    %174 = arith.subf %173, %167 : vector<8x128xf32>
    %175 = arith.mulf %174, %172 : vector<8x128xf32>
    %176 = arith.mulf %167, %145 : vector<8x128xf32>
    %177 = arith.addf %175, %176 : vector<8x128xf32>
    %178 = arith.addi %6, %c3_i32 : i32
    %179 = vector.broadcast %178 : i32 to vector<8x1xi32>
    %180 = arith.cmpi sgt, %5, %179 : vector<8x1xi32>
    %cst_41 = arith.constant 0.000000e+00 : f32
    %181 = vector.shape_cast %180 : vector<8x1xi1> to vector<8x1xi1>
    %182 = vector.broadcast %181 : vector<8x1xi1> to vector<8x128xi1>
    %183 = vector.broadcast %cst_41 : f32 to vector<8x128xf32>
    %184 = arith.select %182, %177, %183 : vector<8x128xi1>, vector<8x128xf32>
    %185 = arith.index_cast %c3_i32 : i32 to index
    %c0_42 = arith.constant 0 : index
    %c0_43 = arith.constant 0 : index
    %186 = vector.load %arg5[%185, %c0_42, %c0_43] : memref<8x8x128xf32, #tpu.memory_space<vmem>>, vector<1x8x128xf32>
    %187 = vector.shape_cast %186 : vector<1x8x128xf32> to vector<8x128xf32>
    %188 = vector.shape_cast %184 : vector<8x128xf32> to vector<1x8x128xf32>
    tpu.vector_store %arg5[%185, %c0_42, %c0_43], %188 {strides = array<i32>} : memref<8x8x128xf32, #tpu.memory_space<vmem>>, vector<1x8x128xf32>,
    %189 = vector.shape_cast %180 : vector<8x1xi1> to vector<8x1xi1>
    %190 = vector.broadcast %189 : vector<8x1xi1> to vector<8x128xi1>
    %191 = arith.select %190, %177, %145 : vector<8x128xi1>, vector<8x128xf32>
    %c4_i32 = arith.constant 4 : i32
    %192 = arith.index_cast %c4_i32 : i32 to index
    %c0_44 = arith.constant 0 : index
    %c0_45 = arith.constant 0 : index
    %193 = vector.load %arg1[%192, %c0_44, %c0_45] : memref<8x8x384xf32, #tpu.memory_space<vmem>>, vector<1x8x384xf32>
    %194 = vector.shape_cast %193 : vector<1x8x384xf32> to vector<8x384xf32>
    %cst_46 = arith.constant dense<0.000000e+00> : vector<8x384xf32>
    %195 = tpu.matmul %191, %3, %cst_46 {dimension_numbers = #tpu.dot_dimension_numbers<[1], [0], [0], [1], [0, 0, 1, 1], [], []>} : vector<8x128xf32>, vector<128x384xf32>, vector<8x384xf32> -> vector<8x384xf32>
    %196 = vector.broadcast %4 : vector<1x384xf32> to vector<8x384xf32>
    %197 = arith.addf %195, %196 : vector<8x384xf32>
    %198 = vector.extract_strided_slice %194 {offsets = [0, 0], sizes = [8, 128], strides = [1, 1]} : vector<8x384xf32> to vector<8x128xf32>
    %199 = vector.extract_strided_slice %197 {offsets = [0, 0], sizes = [8, 128], strides = [1, 1]} : vector<8x384xf32> to vector<8x128xf32>
    %200 = arith.addf %198, %199 : vector<8x128xf32>
    %201 = arith.negf %200 : vector<8x128xf32>
    %202 = math.exp %201 : vector<8x128xf32>
    %cst_47 = arith.constant 1.000000e+00 : f32
    %203 = vector.broadcast %cst_47 : f32 to vector<8x128xf32>
    %204 = arith.addf %203, %202 : vector<8x128xf32>
    %205 = arith.divf %203, %204 : vector<8x128xf32>
    %206 = vector.extract_strided_slice %194 {offsets = [0, 128], sizes = [8, 128], strides = [1, 1]} : vector<8x384xf32> to vector<8x128xf32>
    %207 = vector.extract_strided_slice %197 {offsets = [0, 128], sizes = [8, 128], strides = [1, 1]} : vector<8x384xf32> to vector<8x128xf32>
    %208 = arith.addf %206, %207 : vector<8x128xf32>
    %209 = arith.negf %208 : vector<8x128xf32>
    %210 = math.exp %209 : vector<8x128xf32>
    %cst_48 = arith.constant 1.000000e+00 : f32
    %211 = vector.broadcast %cst_48 : f32 to vector<8x128xf32>
    %212 = arith.addf %211, %210 : vector<8x128xf32>
    %213 = arith.divf %211, %212 : vector<8x128xf32>
    %214 = vector.extract_strided_slice %194 {offsets = [0, 256], sizes = [8, 128], strides = [1, 1]} : vector<8x384xf32> to vector<8x128xf32>
    %215 = vector.extract_strided_slice %197 {offsets = [0, 256], sizes = [8, 128], strides = [1, 1]} : vector<8x384xf32> to vector<8x128xf32>
    %216 = arith.mulf %205, %215 : vector<8x128xf32>
    %217 = arith.addf %214, %216 : vector<8x128xf32>
    %218 = math.tanh %217 : vector<8x128xf32>
    %cst_49 = arith.constant 1.000000e+00 : f32
    %219 = vector.broadcast %cst_49 : f32 to vector<8x128xf32>
    %220 = arith.subf %219, %213 : vector<8x128xf32>
    %221 = arith.mulf %220, %218 : vector<8x128xf32>
    %222 = arith.mulf %213, %191 : vector<8x128xf32>
    %223 = arith.addf %221, %222 : vector<8x128xf32>
    %224 = arith.addi %6, %c4_i32 : i32
    %225 = vector.broadcast %224 : i32 to vector<8x1xi32>
    %226 = arith.cmpi sgt, %5, %225 : vector<8x1xi32>
    %cst_50 = arith.constant 0.000000e+00 : f32
    %227 = vector.shape_cast %226 : vector<8x1xi1> to vector<8x1xi1>
    %228 = vector.broadcast %227 : vector<8x1xi1> to vector<8x128xi1>
    %229 = vector.broadcast %cst_50 : f32 to vector<8x128xf32>
    %230 = arith.select %228, %223, %229 : vector<8x128xi1>, vector<8x128xf32>
    %231 = arith.index_cast %c4_i32 : i32 to index
    %c0_51 = arith.constant 0 : index
    %c0_52 = arith.constant 0 : index
    %232 = vector.load %arg5[%231, %c0_51, %c0_52] : memref<8x8x128xf32, #tpu.memory_space<vmem>>, vector<1x8x128xf32>
    %233 = vector.shape_cast %232 : vector<1x8x128xf32> to vector<8x128xf32>
    %234 = vector.shape_cast %230 : vector<8x128xf32> to vector<1x8x128xf32>
    tpu.vector_store %arg5[%231, %c0_51, %c0_52], %234 {strides = array<i32>} : memref<8x8x128xf32, #tpu.memory_space<vmem>>, vector<1x8x128xf32>,
    %235 = vector.shape_cast %226 : vector<8x1xi1> to vector<8x1xi1>
    %236 = vector.broadcast %235 : vector<8x1xi1> to vector<8x128xi1>
    %237 = arith.select %236, %223, %191 : vector<8x128xi1>, vector<8x128xf32>
    %c5_i32 = arith.constant 5 : i32
    %238 = arith.index_cast %c5_i32 : i32 to index
    %c0_53 = arith.constant 0 : index
    %c0_54 = arith.constant 0 : index
    %239 = vector.load %arg1[%238, %c0_53, %c0_54] : memref<8x8x384xf32, #tpu.memory_space<vmem>>, vector<1x8x384xf32>
    %240 = vector.shape_cast %239 : vector<1x8x384xf32> to vector<8x384xf32>
    %cst_55 = arith.constant dense<0.000000e+00> : vector<8x384xf32>
    %241 = tpu.matmul %237, %3, %cst_55 {dimension_numbers = #tpu.dot_dimension_numbers<[1], [0], [0], [1], [0, 0, 1, 1], [], []>} : vector<8x128xf32>, vector<128x384xf32>, vector<8x384xf32> -> vector<8x384xf32>
    %242 = vector.broadcast %4 : vector<1x384xf32> to vector<8x384xf32>
    %243 = arith.addf %241, %242 : vector<8x384xf32>
    %244 = vector.extract_strided_slice %240 {offsets = [0, 0], sizes = [8, 128], strides = [1, 1]} : vector<8x384xf32> to vector<8x128xf32>
    %245 = vector.extract_strided_slice %243 {offsets = [0, 0], sizes = [8, 128], strides = [1, 1]} : vector<8x384xf32> to vector<8x128xf32>
    %246 = arith.addf %244, %245 : vector<8x128xf32>
    %247 = arith.negf %246 : vector<8x128xf32>
    %248 = math.exp %247 : vector<8x128xf32>
    %cst_56 = arith.constant 1.000000e+00 : f32
    %249 = vector.broadcast %cst_56 : f32 to vector<8x128xf32>
    %250 = arith.addf %249, %248 : vector<8x128xf32>
    %251 = arith.divf %249, %250 : vector<8x128xf32>
    %252 = vector.extract_strided_slice %240 {offsets = [0, 128], sizes = [8, 128], strides = [1, 1]} : vector<8x384xf32> to vector<8x128xf32>
    %253 = vector.extract_strided_slice %243 {offsets = [0, 128], sizes = [8, 128], strides = [1, 1]} : vector<8x384xf32> to vector<8x128xf32>
    %254 = arith.addf %252, %253 : vector<8x128xf32>
    %255 = arith.negf %254 : vector<8x128xf32>
    %256 = math.exp %255 : vector<8x128xf32>
    %cst_57 = arith.constant 1.000000e+00 : f32
    %257 = vector.broadcast %cst_57 : f32 to vector<8x128xf32>
    %258 = arith.addf %257, %256 : vector<8x128xf32>
    %259 = arith.divf %257, %258 : vector<8x128xf32>
    %260 = vector.extract_strided_slice %240 {offsets = [0, 256], sizes = [8, 128], strides = [1, 1]} : vector<8x384xf32> to vector<8x128xf32>
    %261 = vector.extract_strided_slice %243 {offsets = [0, 256], sizes = [8, 128], strides = [1, 1]} : vector<8x384xf32> to vector<8x128xf32>
    %262 = arith.mulf %251, %261 : vector<8x128xf32>
    %263 = arith.addf %260, %262 : vector<8x128xf32>
    %264 = math.tanh %263 : vector<8x128xf32>
    %cst_58 = arith.constant 1.000000e+00 : f32
    %265 = vector.broadcast %cst_58 : f32 to vector<8x128xf32>
    %266 = arith.subf %265, %259 : vector<8x128xf32>
    %267 = arith.mulf %266, %264 : vector<8x128xf32>
    %268 = arith.mulf %259, %237 : vector<8x128xf32>
    %269 = arith.addf %267, %268 : vector<8x128xf32>
    %270 = arith.addi %6, %c5_i32 : i32
    %271 = vector.broadcast %270 : i32 to vector<8x1xi32>
    %272 = arith.cmpi sgt, %5, %271 : vector<8x1xi32>
    %cst_59 = arith.constant 0.000000e+00 : f32
    %273 = vector.shape_cast %272 : vector<8x1xi1> to vector<8x1xi1>
    %274 = vector.broadcast %273 : vector<8x1xi1> to vector<8x128xi1>
    %275 = vector.broadcast %cst_59 : f32 to vector<8x128xf32>
    %276 = arith.select %274, %269, %275 : vector<8x128xi1>, vector<8x128xf32>
    %277 = arith.index_cast %c5_i32 : i32 to index
    %c0_60 = arith.constant 0 : index
    %c0_61 = arith.constant 0 : index
    %278 = vector.load %arg5[%277, %c0_60, %c0_61] : memref<8x8x128xf32, #tpu.memory_space<vmem>>, vector<1x8x128xf32>
    %279 = vector.shape_cast %278 : vector<1x8x128xf32> to vector<8x128xf32>
    %280 = vector.shape_cast %276 : vector<8x128xf32> to vector<1x8x128xf32>
    tpu.vector_store %arg5[%277, %c0_60, %c0_61], %280 {strides = array<i32>} : memref<8x8x128xf32, #tpu.memory_space<vmem>>, vector<1x8x128xf32>,
    %281 = vector.shape_cast %272 : vector<8x1xi1> to vector<8x1xi1>
    %282 = vector.broadcast %281 : vector<8x1xi1> to vector<8x128xi1>
    %283 = arith.select %282, %269, %237 : vector<8x128xi1>, vector<8x128xf32>
    %c6_i32 = arith.constant 6 : i32
    %284 = arith.index_cast %c6_i32 : i32 to index
    %c0_62 = arith.constant 0 : index
    %c0_63 = arith.constant 0 : index
    %285 = vector.load %arg1[%284, %c0_62, %c0_63] : memref<8x8x384xf32, #tpu.memory_space<vmem>>, vector<1x8x384xf32>
    %286 = vector.shape_cast %285 : vector<1x8x384xf32> to vector<8x384xf32>
    %cst_64 = arith.constant dense<0.000000e+00> : vector<8x384xf32>
    %287 = tpu.matmul %283, %3, %cst_64 {dimension_numbers = #tpu.dot_dimension_numbers<[1], [0], [0], [1], [0, 0, 1, 1], [], []>} : vector<8x128xf32>, vector<128x384xf32>, vector<8x384xf32> -> vector<8x384xf32>
    %288 = vector.broadcast %4 : vector<1x384xf32> to vector<8x384xf32>
    %289 = arith.addf %287, %288 : vector<8x384xf32>
    %290 = vector.extract_strided_slice %286 {offsets = [0, 0], sizes = [8, 128], strides = [1, 1]} : vector<8x384xf32> to vector<8x128xf32>
    %291 = vector.extract_strided_slice %289 {offsets = [0, 0], sizes = [8, 128], strides = [1, 1]} : vector<8x384xf32> to vector<8x128xf32>
    %292 = arith.addf %290, %291 : vector<8x128xf32>
    %293 = arith.negf %292 : vector<8x128xf32>
    %294 = math.exp %293 : vector<8x128xf32>
    %cst_65 = arith.constant 1.000000e+00 : f32
    %295 = vector.broadcast %cst_65 : f32 to vector<8x128xf32>
    %296 = arith.addf %295, %294 : vector<8x128xf32>
    %297 = arith.divf %295, %296 : vector<8x128xf32>
    %298 = vector.extract_strided_slice %286 {offsets = [0, 128], sizes = [8, 128], strides = [1, 1]} : vector<8x384xf32> to vector<8x128xf32>
    %299 = vector.extract_strided_slice %289 {offsets = [0, 128], sizes = [8, 128], strides = [1, 1]} : vector<8x384xf32> to vector<8x128xf32>
    %300 = arith.addf %298, %299 : vector<8x128xf32>
    %301 = arith.negf %300 : vector<8x128xf32>
    %302 = math.exp %301 : vector<8x128xf32>
    %cst_66 = arith.constant 1.000000e+00 : f32
    %303 = vector.broadcast %cst_66 : f32 to vector<8x128xf32>
    %304 = arith.addf %303, %302 : vector<8x128xf32>
    %305 = arith.divf %303, %304 : vector<8x128xf32>
    %306 = vector.extract_strided_slice %286 {offsets = [0, 256], sizes = [8, 128], strides = [1, 1]} : vector<8x384xf32> to vector<8x128xf32>
    %307 = vector.extract_strided_slice %289 {offsets = [0, 256], sizes = [8, 128], strides = [1, 1]} : vector<8x384xf32> to vector<8x128xf32>
    %308 = arith.mulf %297, %307 : vector<8x128xf32>
    %309 = arith.addf %306, %308 : vector<8x128xf32>
    %310 = math.tanh %309 : vector<8x128xf32>
    %cst_67 = arith.constant 1.000000e+00 : f32
    %311 = vector.broadcast %cst_67 : f32 to vector<8x128xf32>
    %312 = arith.subf %311, %305 : vector<8x128xf32>
    %313 = arith.mulf %312, %310 : vector<8x128xf32>
    %314 = arith.mulf %305, %283 : vector<8x128xf32>
    %315 = arith.addf %313, %314 : vector<8x128xf32>
    %316 = arith.addi %6, %c6_i32 : i32
    %317 = vector.broadcast %316 : i32 to vector<8x1xi32>
    %318 = arith.cmpi sgt, %5, %317 : vector<8x1xi32>
    %cst_68 = arith.constant 0.000000e+00 : f32
    %319 = vector.shape_cast %318 : vector<8x1xi1> to vector<8x1xi1>
    %320 = vector.broadcast %319 : vector<8x1xi1> to vector<8x128xi1>
    %321 = vector.broadcast %cst_68 : f32 to vector<8x128xf32>
    %322 = arith.select %320, %315, %321 : vector<8x128xi1>, vector<8x128xf32>
    %323 = arith.index_cast %c6_i32 : i32 to index
    %c0_69 = arith.constant 0 : index
    %c0_70 = arith.constant 0 : index
    %324 = vector.load %arg5[%323, %c0_69, %c0_70] : memref<8x8x128xf32, #tpu.memory_space<vmem>>, vector<1x8x128xf32>
    %325 = vector.shape_cast %324 : vector<1x8x128xf32> to vector<8x128xf32>
    %326 = vector.shape_cast %322 : vector<8x128xf32> to vector<1x8x128xf32>
    tpu.vector_store %arg5[%323, %c0_69, %c0_70], %326 {strides = array<i32>} : memref<8x8x128xf32, #tpu.memory_space<vmem>>, vector<1x8x128xf32>,
    %327 = vector.shape_cast %318 : vector<8x1xi1> to vector<8x1xi1>
    %328 = vector.broadcast %327 : vector<8x1xi1> to vector<8x128xi1>
    %329 = arith.select %328, %315, %283 : vector<8x128xi1>, vector<8x128xf32>
    %c7_i32 = arith.constant 7 : i32
    %330 = arith.index_cast %c7_i32 : i32 to index
    %c0_71 = arith.constant 0 : index
    %c0_72 = arith.constant 0 : index
    %331 = vector.load %arg1[%330, %c0_71, %c0_72] : memref<8x8x384xf32, #tpu.memory_space<vmem>>, vector<1x8x384xf32>
    %332 = vector.shape_cast %331 : vector<1x8x384xf32> to vector<8x384xf32>
    %cst_73 = arith.constant dense<0.000000e+00> : vector<8x384xf32>
    %333 = tpu.matmul %329, %3, %cst_73 {dimension_numbers = #tpu.dot_dimension_numbers<[1], [0], [0], [1], [0, 0, 1, 1], [], []>} : vector<8x128xf32>, vector<128x384xf32>, vector<8x384xf32> -> vector<8x384xf32>
    %334 = vector.broadcast %4 : vector<1x384xf32> to vector<8x384xf32>
    %335 = arith.addf %333, %334 : vector<8x384xf32>
    %336 = vector.extract_strided_slice %332 {offsets = [0, 0], sizes = [8, 128], strides = [1, 1]} : vector<8x384xf32> to vector<8x128xf32>
    %337 = vector.extract_strided_slice %335 {offsets = [0, 0], sizes = [8, 128], strides = [1, 1]} : vector<8x384xf32> to vector<8x128xf32>
    %338 = arith.addf %336, %337 : vector<8x128xf32>
    %339 = arith.negf %338 : vector<8x128xf32>
    %340 = math.exp %339 : vector<8x128xf32>
    %cst_74 = arith.constant 1.000000e+00 : f32
    %341 = vector.broadcast %cst_74 : f32 to vector<8x128xf32>
    %342 = arith.addf %341, %340 : vector<8x128xf32>
    %343 = arith.divf %341, %342 : vector<8x128xf32>
    %344 = vector.extract_strided_slice %332 {offsets = [0, 128], sizes = [8, 128], strides = [1, 1]} : vector<8x384xf32> to vector<8x128xf32>
    %345 = vector.extract_strided_slice %335 {offsets = [0, 128], sizes = [8, 128], strides = [1, 1]} : vector<8x384xf32> to vector<8x128xf32>
    %346 = arith.addf %344, %345 : vector<8x128xf32>
    %347 = arith.negf %346 : vector<8x128xf32>
    %348 = math.exp %347 : vector<8x128xf32>
    %cst_75 = arith.constant 1.000000e+00 : f32
    %349 = vector.broadcast %cst_75 : f32 to vector<8x128xf32>
    %350 = arith.addf %349, %348 : vector<8x128xf32>
    %351 = arith.divf %349, %350 : vector<8x128xf32>
    %352 = vector.extract_strided_slice %332 {offsets = [0, 256], sizes = [8, 128], strides = [1, 1]} : vector<8x384xf32> to vector<8x128xf32>
    %353 = vector.extract_strided_slice %335 {offsets = [0, 256], sizes = [8, 128], strides = [1, 1]} : vector<8x384xf32> to vector<8x128xf32>
    %354 = arith.mulf %343, %353 : vector<8x128xf32>
    %355 = arith.addf %352, %354 : vector<8x128xf32>
    %356 = math.tanh %355 : vector<8x128xf32>
    %cst_76 = arith.constant 1.000000e+00 : f32
    %357 = vector.broadcast %cst_76 : f32 to vector<8x128xf32>
    %358 = arith.subf %357, %351 : vector<8x128xf32>
    %359 = arith.mulf %358, %356 : vector<8x128xf32>
    %360 = arith.mulf %351, %329 : vector<8x128xf32>
    %361 = arith.addf %359, %360 : vector<8x128xf32>
    %362 = arith.addi %6, %c7_i32 : i32
    %363 = vector.broadcast %362 : i32 to vector<8x1xi32>
    %364 = arith.cmpi sgt, %5, %363 : vector<8x1xi32>
    %cst_77 = arith.constant 0.000000e+00 : f32
    %365 = vector.shape_cast %364 : vector<8x1xi1> to vector<8x1xi1>
    %366 = vector.broadcast %365 : vector<8x1xi1> to vector<8x128xi1>
    %367 = vector.broadcast %cst_77 : f32 to vector<8x128xf32>
    %368 = arith.select %366, %361, %367 : vector<8x128xi1>, vector<8x128xf32>
    %369 = arith.index_cast %c7_i32 : i32 to index
    %c0_78 = arith.constant 0 : index
    %c0_79 = arith.constant 0 : index
    %370 = vector.load %arg5[%369, %c0_78, %c0_79] : memref<8x8x128xf32, #tpu.memory_space<vmem>>, vector<1x8x128xf32>
    %371 = vector.shape_cast %370 : vector<1x8x128xf32> to vector<8x128xf32>
    %372 = vector.shape_cast %368 : vector<8x128xf32> to vector<1x8x128xf32>
    tpu.vector_store %arg5[%369, %c0_78, %c0_79], %372 {strides = array<i32>} : memref<8x8x128xf32, #tpu.memory_space<vmem>>, vector<1x8x128xf32>,
    %373 = vector.shape_cast %364 : vector<8x1xi1> to vector<8x1xi1>
    %374 = vector.broadcast %373 : vector<8x1xi1> to vector<8x128xi1>
    %375 = arith.select %374, %361, %329 : vector<8x128xi1>, vector<8x128xf32>
    %c8_i32_80 = arith.constant 8 : i32
    %c0_81 = arith.constant 0 : index
    %c0_82 = arith.constant 0 : index
    %376 = vector.load %arg6[%c0_81, %c0_82] : memref<8x128xf32, #tpu.memory_space<vmem>>, vector<8x128xf32>
    tpu.vector_store %arg6[%c0_81, %c0_82], %375 {strides = array<i32>} : memref<8x128xf32, #tpu.memory_space<vmem>>, vector<8x128xf32>,
    return
  }
  func.func @transform_0(%arg0: i32) -> (i32, i32, i32) {
    %c0_i32 = arith.constant 0 : i32
    %c0_i32_0 = arith.constant 0 : i32
    %c0_i32_1 = arith.constant 0 : i32
    return %arg0, %c0_i32, %c0_i32_0 : i32, i32, i32
  }
  func.func @transform_1(%arg0: i32) -> (i32, i32) {
    %c0_i32 = arith.constant 0 : i32
    %c0_i32_0 = arith.constant 0 : i32
    %c0_i32_1 = arith.constant 0 : i32
    return %c0_i32, %c0_i32_0 : i32, i32
  }
  func.func @transform_2(%arg0: i32) -> (i32, i32) {
    %c0_i32 = arith.constant 0 : i32
    %c0_i32_0 = arith.constant 0 : i32
    %c0_i32_1 = arith.constant 0 : i32
    return %c0_i32, %c0_i32_0 : i32, i32
  }
  func.func @transform_3(%arg0: i32) -> (i32, i32) {
    %c0_i32 = arith.constant 0 : i32
    %c0_i32_0 = arith.constant 0 : i32
    %c0_i32_1 = arith.constant 0 : i32
    return %c0_i32, %c0_i32_0 : i32, i32
  }
  func.func @transform_4(%arg0: i32) -> (i32, i32, i32) {
    %c0_i32 = arith.constant 0 : i32
    %c0_i32_0 = arith.constant 0 : i32
    %c0_i32_1 = arith.constant 0 : i32
    return %arg0, %c0_i32, %c0_i32_0 : i32, i32, i32
  }
  func.func @transform_5(%arg0: i32) -> (i32, i32) {
    %c0_i32 = arith.constant 0 : i32
    %c0_i32_0 = arith.constant 0 : i32
    %c0_i32_1 = arith.constant 0 : i32
    return %c0_i32, %c0_i32_0 : i32, i32
  }
}

</mosaic_0001>

<llo_original>
// kernel: tpu_custom_call.1
$region0: #{tpu_custom_call.1}
  #allocation0 [shape = 'u32[]', space=smem, size = 0x4, offset = 0x4, fixed_abs, tag = 'smem constant byte address 0x4 - core index']
  #allocation1 [shape = 'u32[144,128]{1,0:T(1,128)}', space=vmem, size = 0x12000, scoped, tag = 'internal scratch']
  %s0 = inlined_call_operand.hbm [shape: f32[8,8,384], index: 0, kind: input, shape index: {}]
  %s1 = inlined_call_operand.vmem [shape: s32[8,1], index: 1, kind: input, shape index: {}]
  %s2 = inlined_call_operand.hbm [shape: f32[128,384], index: 2, kind: input, shape index: {}]
  %s3 = inlined_call_operand.vmem [shape: f32[1,384], index: 3, kind: input, shape index: {}]
  %s4 = inlined_call_operand.hbm [shape: f32[8,8,128], index: 4, kind: output, shape index: {0}]
  %s5 = inlined_call_operand.hbm [shape: f32[8,128], index: 5, kind: output, shape index: {1}]
  %6 = xla_tuple %s4, %s5
  %s7 = sld [smem:[#allocation0]]
  $region46: #{tpu_custom_call.1} parent=0
    _
  %s9 = ssub.s32 1, %s7
  %s10 = scalar_select 0, %s9, %s7
  $region1: #{tpu_custom_call.1} parent=0
    #allocation2 [shape = 'u8[98304]{0}', space=vmem, size = 0x18000, scoped, tag = 'input window, operand 0, single buffered']
    #allocation3 [shape = 's32[1]{0}', space=sflag, size = 0x4, scoped, tag = 'scoped memory for tpu_custom_call.1']
    #allocation4 [shape = 's32[1]{0}', space=sflag, size = 0x4, scoped, tag = 'scoped memory for tpu_custom_call.1']
    #allocation5 [shape = 'u8[196608]{0}', space=vmem, size = 0x30000, scoped, tag = 'input window, operand 2, single buffered']
    #allocation6 [shape = 's32[1]{0}', space=sflag, size = 0x4, scoped, tag = 'scoped memory for tpu_custom_call.1']
    #allocation7 [shape = 'u8[32768]{0}', space=vmem, size = 0x8000, scoped, tag = 'output window, operand 0, single buffered']
    #allocation8 [shape = 'u8[4096]{0}', space=vmem, size = 0x1000, scoped, tag = 'output window, operand 1, single buffered']
    #allocation9 [shape = 's32[1]{0}', space=sflag, size = 0x4, scoped, tag = 'scoped memory for tpu_custom_call.1']
    %11 = vsyncpa [#allocation3], 0
    %12 = vsyncpa [#allocation6], 0
    %13 = vsyncpa [#allocation4], 0
    %14 = vsyncpa [#allocation9], 0
    // Predicated region
    $region2: #{tpu_custom_call.1} parent=1 // pred_check
      _
    $region3: #{tpu_custom_call.1} parent=1 // pred_check_branch
      %16 = sbr.rel (0) target = $region5
    $region4: #{tpu_custom_call.1} parent=1 // pred_region
      %s18 = ssub.s32 3072, 3072
      %19 = vsyncadd [#allocation3], %s18
      %s20 = sshll.u32 [#allocation2], 4
      %s21 = int_to_ptr.vmem [resolvable:$true] %s20
      %26 = dma.hbm_to_vmem [thread:$0]  %s0, 3072, %s21, [#allocation3], 384, 384, 24
    $region5: #{tpu_custom_call.1} parent=1 // pred_fallthru
      _
    // Predicated region
    $region6: #{tpu_custom_call.1} parent=1 // pred_check
      _
    $region7: #{tpu_custom_call.1} parent=1 // pred_check_branch
      %28 = sbr.rel (0) target = $region9
    $region8: #{tpu_custom_call.1} parent=1 // pred_region
      _
    $region9: #{tpu_custom_call.1} parent=1 // pred_fallthru
      _
    // Predicated region
    $region10: #{tpu_custom_call.1} parent=1 // pred_check
      _
    $region11: #{tpu_custom_call.1} parent=1 // pred_check_branch
      %30 = sbr.rel (0) target = $region13
    $region12: #{tpu_custom_call.1} parent=1 // pred_region
      %s32 = ssub.s32 6144, 6144
      %33 = vsyncadd [#allocation6], %s32
      %s34 = sshll.u32 [#allocation5], 4
      %s35 = int_to_ptr.vmem [resolvable:$true] %s34
      %40 = dma.hbm_to_vmem [thread:$0]  %s2, 6144, %s35, [#allocation6], 384, 384, 24
    $region13: #{tpu_custom_call.1} parent=1 // pred_fallthru
      _
    // Predicated region
    $region14: #{tpu_custom_call.1} parent=1 // pred_check
      _
    $region15: #{tpu_custom_call.1} parent=1 // pred_check_branch
      %42 = sbr.rel (0) target = $region17
    $region16: #{tpu_custom_call.1} parent=1 // pred_region
      _
    $region17: #{tpu_custom_call.1} parent=1 // pred_fallthru
      _
    // Predicated region
    $region18: #{tpu_custom_call.1} parent=1 // pred_check
      _
    $region19: #{tpu_custom_call.1} parent=1 // pred_check_branch
      %44 = sbr.rel (0) target = $region21
    $region20: #{tpu_custom_call.1} parent=1 // pred_region
      %45 = dma.done [#allocation3], 3072
    $region21: #{tpu_custom_call.1} parent=1 // pred_fallthru
      _
    // Predicated region
    $region22: #{tpu_custom_call.1} parent=1 // pred_check
      _
    $region23: #{tpu_custom_call.1} parent=1 // pred_check_branch
      %47 = sbr.rel (0) target = $region25
    $region24: #{tpu_custom_call.1} parent=1 // pred_region
      %48 = dma.done [#allocation6], 6144
    $region25: #{tpu_custom_call.1} parent=1 // pred_fallthru
      _
    %p49 = scmp.eq.s32.totalorder 0, 0
    // Predicated region
    $region26: #{tpu_custom_call.1} parent=1 // pred_check
      %p50 = pneg %p49
    $region27: #{tpu_custom_call.1} parent=1 // pred_check_branch
      %52 = sbr.rel (%p50) target = $region29
    $region28: #{tpu_custom_call.1} parent=1 // pred_region
      %53 = vst [vmem:[#allocation8] sm:$0xff] 0.0
    $region29: #{tpu_custom_call.1} parent=1 // pred_fallthru
      _
    %v54 = vld [vmem:[#allocation5] sm:$0xff]
    %v55 = vld [vmem:[#allocation5 + $0x8] sm:$0xff]
    %v56 = vld [vmem:[#allocation5 + $0x10] sm:$0xff]
    %v57 = vld [vmem:[#allocation5 + $0x18] sm:$0xff]
    %v58 = vld [vmem:[#allocation5 + $0x20] sm:$0xff]
    %v59 = vld [vmem:[#allocation5 + $0x28] sm:$0xff]
    %v60 = vld [vmem:[#allocation5 + $0x30] sm:$0xff]
    %v61 = vld [vmem:[#allocation5 + $0x38] sm:$0xff]
    %v62 = vld [vmem:[#allocation5 + $0x40] sm:$0xff]
    %v63 = vld [vmem:[#allocation5 + $0x48] sm:$0xff]
    %v64 = vld [vmem:[#allocation5 + $0x50] sm:$0xff]
    %v65 = vld [vmem:[#allocation5 + $0x58] sm:$0xff]
    %v66 = vld [vmem:[#allocation5 + $0x60] sm:$0xff]
    %v67 = vld [vmem:[#allocation5 + $0x68] sm:$0xff]
    %v68 = vld [vmem:[#allocation5 + $0x70] sm:$0xff]
    %v69 = vld [vmem:[#allocation5 + $0x78] sm:$0xff]
    %v70 = vld [vmem:[#allocation5 + $0x80] sm:$0xff]
    %v71 = vld [vmem:[#allocation5 + $0x88] sm:$0xff]
    %v72 = vld [vmem:[#allocation5 + $0x90] sm:$0xff]
    %v73 = vld [vmem:[#allocation5 + $0x98] sm:$0xff]
    %v74 = vld [vmem:[#allocation5 + $0xa0] sm:$0xff]
    %v75 = vld [vmem:[#allocation5 + $0xa8] sm:$0xff]
    %v76 = vld [vmem:[#allocation5 + $0xb0] sm:$0xff]
    %v77 = vld [vmem:[#allocation5 + $0xb8] sm:$0xff]
    %v78 = vld [vmem:[#allocation5 + $0xc0] sm:$0xff]
    %v79 = vld [vmem:[#allocation5 + $0xc8] sm:$0xff]
    %v80 = vld [vmem:[#allocation5 + $0xd0] sm:$0xff]
    %v81 = vld [vmem:[#allocation5 + $0xd8] sm:$0xff]
    %v82 = vld [vmem:[#allocation5 + $0xe0] sm:$0xff]
    %v83 = vld [vmem:[#allocation5 + $0xe8] sm:$0xff]
    %v84 = vld [vmem:[#allocation5 + $0xf0] sm:$0xff]
    %v85 = vld [vmem:[#allocation5 + $0xf8] sm:$0xff]
    %v86 = vld [vmem:[#allocation5 + $0x100] sm:$0xff]
    %v87 = vld [vmem:[#allocation5 + $0x108] sm:$0xff]
    %v88 = vld [vmem:[#allocation5 + $0x110] sm:$0xff]
    %v89 = vld [vmem:[#allocation5 + $0x118] sm:$0xff]
    %v90 = vld [vmem:[#allocation5 + $0x120] sm:$0xff]
    %v91 = vld [vmem:[#allocation5 + $0x128] sm:$0xff]
    %v92 = vld [vmem:[#allocation5 + $0x130] sm:$0xff]
    %v93 = vld [vmem:[#allocation5 + $0x138] sm:$0xff]
    %v94 = vld [vmem:[#allocation5 + $0x140] sm:$0xff]
    %v95 = vld [vmem:[#allocation5 + $0x148] sm:$0xff]
    %v96 = vld [vmem:[#allocation5 + $0x150] sm:$0xff]
    %v97 = vld [vmem:[#allocation5 + $0x158] sm:$0xff]
    %v98 = vld [vmem:[#allocation5 + $0x160] sm:$0xff]
    %v99 = vld [vmem:[#allocation5 + $0x168] sm:$0xff]
    %v100 = vld [vmem:[#allocation5 + $0x170] sm:$0xff]
    %v101 = vld [vmem:[#allocation5 + $0x178] sm:$0xff]
    %v102 = vld [vmem:[%s3] sm:$0x7]
    %v103 = vld [vmem:[%s1] sm:$0xff]
    %s104 = smul.u32 0, 8
    %v105 = vld [vmem:[#allocation8] sm:$0xff]
    %v106 = vld [vmem:[#allocation2] sm:$0xff]
    %v107 = vld [vmem:[#allocation2 + $0x8] sm:$0xff]
    %v108 = vld [vmem:[#allocation2 + $0x10] sm:$0xff]
    %v110 = vlaneseq
    %v111 = vshrl.u32 %v110, 7
    %v112 = vsub.s32 0, %v111
    %v113 = vrot.slane %v102, %v112
    %v114 = vlaneseq
    %v115 = vshrl.u32 %v114, 7
    %v116 = vsub.s32 1, %v115
    %v117 = vrot.slane %v102, %v116
    %v118 = vlaneseq
    %v119 = vshrl.u32 %v118, 7
    %v120 = vsub.s32 2, %v119
    %v121 = vrot.slane %v102, %v120
    %125 = vmatprep.subr.mxu0 %v100
    %126 = vmatpush1.msra.mxu0 %v99
    %127 = vmatprep.subr.mxu0 %v97
    %128 = vmatpush1.msra.mxu0 %v96
    %129 = vmatprep.subr.mxu0 %v94
    %130 = vmatpush1.msra.mxu0 %v93
    %131 = vmatprep.subr.mxu0 %v91
    %132 = vmatpush1.msra.mxu0 %v90
    %133 = vmatprep.subr.mxu0 %v88
    %134 = vmatpush1.msra.mxu0 %v87
    %135 = vmatprep.subr.mxu0 %v85
    %136 = vmatpush1.msra.mxu0 %v84
    %137 = vmatprep.subr.mxu0 %v82
    %138 = vmatpush1.msra.mxu0 %v81
    %139 = vmatprep.subr.mxu0 %v79
    %140 = vmatpush1.msra.mxu0 %v78
    %141 = vmatprep.subr.mxu0 %v76
    %142 = vmatpush1.msra.mxu0 %v75
    %143 = vmatprep.subr.mxu0 %v73
    %144 = vmatpush1.msra.mxu0 %v72
    %145 = vmatprep.subr.mxu0 %v70
    %146 = vmatpush1.msra.mxu0 %v69
    %147 = vmatprep.subr.mxu0 %v67
    %148 = vmatpush1.msra.mxu0 %v66
    %149 = vmatprep.subr.mxu0 %v64
    %150 = vmatpush1.msra.mxu0 %v63
    %151 = vmatprep.subr.mxu0 %v61
    %152 = vmatpush1.msra.mxu0 %v60
    %153 = vmatprep.subr.mxu0 %v58
    %154 = vmatpush1.msra.mxu0 %v57
    %155 = vmatprep.subr.mxu0 %v55
    %156 = vmatpush1.msra.mxu0 %v54
    %157 = vmatprep.subr.mxu0 0.0
    %158 = vmatpush2.msra.mxu0 0.0
    %159 = vmatprep.subr.mxu0 0.0
    %160 = vmatpush2.msra.mxu0 0.0
    %161 = vmatprep.subr.mxu0 0.0
    %162 = vmatpush2.msra.mxu0 0.0
    %163 = vmatprep.subr.mxu0 0.0
    %164 = vmatpush2.msra.mxu0 0.0
    %165 = vmatprep.subr.mxu0 0.0
    %166 = vmatpush2.msra.mxu0 0.0
    %167 = vmatprep.subr.mxu0 0.0
    %168 = vmatpush2.msra.mxu0 0.0
    %169 = vmatprep.subr.mxu0 0.0
    %170 = vmatpush2.msra.mxu0 0.0
    %171 = vmatprep.subr.mxu0 0.0
    %172 = vmatpush2.msra.mxu0 0.0
    %173 = vmatprep.subr.mxu0 0.0
    %174 = vmatpush2.msra.mxu0 0.0
    %175 = vmatprep.subr.mxu0 0.0
    %176 = vmatpush2.msra.mxu0 0.0
    %177 = vmatprep.subr.mxu0 0.0
    %178 = vmatpush2.msra.mxu0 0.0
    %179 = vmatprep.subr.mxu0 0.0
    %180 = vmatpush2.msra.mxu0 0.0
    %181 = vmatprep.subr.mxu0 0.0
    %182 = vmatpush2.msra.mxu0 0.0
    %183 = vmatprep.subr.mxu0 0.0
    %184 = vmatpush2.msra.mxu0 0.0
    %185 = vmatprep.subr.mxu0 0.0
    %186 = vmatpush2.msra.mxu0 0.0
    %187 = vmatprep.subr.mxu0 0.0
    %188 = vmatpush2.msra.mxu0 0.0
    %189 = vmatprep.mubr.f32.mxu0 0.0
    %190 = vmatmul.mubr.f32.gmra.mxu0 %v105
    %v191 = vpop.f32.mrf.mxu0
    %v192 = vadd.f32 %v113, %v191
    %v193 = vpop.f32.mrf.mxu0
    %v194 = vadd.f32 %v117, %v193
    %195 = vdwg.mxu0
    %196 = vmatprep.subr.mxu0 0.0
    %197 = vmatpush1.msra.mxu0 %v101
    %198 = vmatprep.subr.mxu0 0.0
    %199 = vmatpush1.msra.mxu0 %v98
    %200 = vmatprep.subr.mxu0 0.0
    %201 = vmatpush1.msra.mxu0 %v95
    %202 = vmatprep.subr.mxu0 0.0
    %203 = vmatpush1.msra.mxu0 %v92
    %204 = vmatprep.subr.mxu0 0.0
    %205 = vmatpush1.msra.mxu0 %v89
    %206 = vmatprep.subr.mxu0 0.0
    %207 = vmatpush1.msra.mxu0 %v86
    %208 = vmatprep.subr.mxu0 0.0
    %209 = vmatpush1.msra.mxu0 %v83
    %210 = vmatprep.subr.mxu0 0.0
    %211 = vmatpush1.msra.mxu0 %v80
    %212 = vmatprep.subr.mxu0 0.0
    %213 = vmatpush1.msra.mxu0 %v77
    %214 = vmatprep.subr.mxu0 0.0
    %215 = vmatpush1.msra.mxu0 %v74
    %216 = vmatprep.subr.mxu0 0.0
    %217 = vmatpush1.msra.mxu0 %v71
    %218 = vmatprep.subr.mxu0 0.0
    %219 = vmatpush1.msra.mxu0 %v68
    %220 = vmatprep.subr.mxu0 0.0
    %221 = vmatpush1.msra.mxu0 %v65
    %222 = vmatprep.subr.mxu0 0.0
    %223 = vmatpush1.msra.mxu0 %v62
    %224 = vmatprep.subr.mxu0 0.0
    %225 = vmatpush1.msra.mxu0 %v59
    %226 = vmatprep.subr.mxu0 0.0
    %227 = vmatpush1.msra.mxu0 %v56
    %228 = vmatprep.subr.mxu0 0.0
    %229 = vmatpush2.msra.mxu0 0.0
    %230 = vmatprep.subr.mxu0 0.0
    %231 = vmatpush2.msra.mxu0 0.0
    %232 = vmatprep.subr.mxu0 0.0
    %233 = vmatpush2.msra.mxu0 0.0
    %234 = vmatprep.subr.mxu0 0.0
    %235 = vmatpush2.msra.mxu0 0.0
    %236 = vmatprep.subr.mxu0 0.0
    %237 = vmatpush2.msra.mxu0 0.0
    %238 = vmatprep.subr.mxu0 0.0
    %239 = vmatpush2.msra.mxu0 0.0
    %240 = vmatprep.subr.mxu0 0.0
    %241 = vmatpush2.msra.mxu0 0.0
    %242 = vmatprep.subr.mxu0 0.0
    %243 = vmatpush2.msra.mxu0 0.0
    %244 = vmatprep.subr.mxu0 0.0
    %245 = vmatpush2.msra.mxu0 0.0
    %246 = vmatprep.subr.mxu0 0.0
    %247 = vmatpush2.msra.mxu0 0.0
    %248 = vmatprep.subr.mxu0 0.0
    %249 = vmatpush2.msra.mxu0 0.0
    %250 = vmatprep.subr.mxu0 0.0
    %251 = vmatpush2.msra.mxu0 0.0
    %252 = vmatprep.subr.mxu0 0.0
    %253 = vmatpush2.msra.mxu0 0.0
    %254 = vmatprep.subr.mxu0 0.0
    %255 = vmatpush2.msra.mxu0 0.0
    %256 = vmatprep.subr.mxu0 0.0
    %257 = vmatpush2.msra.mxu0 0.0
    %258 = vmatprep.subr.mxu0 0.0
    %259 = vmatpush2.msra.mxu0 0.0
    %260 = vmatprep.mubr.f32.mxu0 0.0
    %261 = vmatmul.mubr.f32.gmra.mxu0 %v105
    %v262 = vpop.f32.mrf.mxu0
    %v263 = vadd.f32 %v121, %v262
    %v264 = vpop.f32.mrf.mxu0
    %265 = vdwg.mxu0
    %v266 = vadd.f32 %v106, %v192
    %v267 = vxor.u32 %v266, 2147483648
    %v268 = vmul.f32 %v267, 1.442695
    %v269 = vpow.pop %v268
    %v270 = vadd.f32 %v269, 1.0
    %v271 = vrcp.pop %v270
    %v272 = vmul.f32 1.0, %v271
    %v273 = vadd.f32 %v107, %v194
    %v274 = vxor.u32 %v273, 2147483648
    %v275 = vmul.f32 %v274, 1.442695
    %v276 = vpow.pop %v275
    %v277 = vadd.f32 %v276, 1.0
    %v278 = vrcp.pop %v277
    %v279 = vmul.f32 1.0, %v278
    %v280 = vmul.f32 %v272, %v263
    %v281 = vadd.f32 %v108, %v280
    %v282 = vtanh.pop %v281
    %v283 = vsub.f32 1.0, %v279
    %v284 = vmul.f32 %v283, %v282
    %v285 = vmul.f32 %v279, %v105
    %v286 = vadd.f32 %v284, %v285
    %v287 = vstv %s104
    %vm288 = vcmp.gt.s32.totalorder %v103, %v287
    %v289 = vsel %vm288, 1, 0
    %290 = vset.pattern.permute.xlu0 0
    %291 = vperm.xlu0 %290, %v289
    %v292 = vpop.permute.xlu0 %291
    %vm293 = vcmp.eq.s32.totalorder %v292, 1
    %v294 = vsel %vm293, %v286, 0.0
    %295 = vst [vmem:[#allocation7] sm:$0xff] %v294
    %v296 = vsel %vm293, %v286, %v105
    %s297 = scalar_lea.vmem [#allocation2], 24
    %v298 = vld [vmem:[%s297] sm:$0xff]
    %v299 = vld [vmem:[%s297 + $0x8] sm:$0xff]
    %v300 = vld [vmem:[%s297 + $0x10] sm:$0xff]
    %301 = vmatprep.subr.mxu0 %v100
    %302 = vmatpush1.msra.mxu0 %v99
    %303 = vmatprep.subr.mxu0 %v97
    %304 = vmatpush1.msra.mxu0 %v96
    %305 = vmatprep.subr.mxu0 %v94
    %306 = vmatpush1.msra.mxu0 %v93
    %307 = vmatprep.subr.mxu0 %v91
    %308 = vmatpush1.msra.mxu0 %v90
    %309 = vmatprep.subr.mxu0 %v88
    %310 = vmatpush1.msra.mxu0 %v87
    %311 = vmatprep.subr.mxu0 %v85
    %312 = vmatpush1.msra.mxu0 %v84
    %313 = vmatprep.subr.mxu0 %v82
    %314 = vmatpush1.msra.mxu0 %v81
    %315 = vmatprep.subr.mxu0 %v79
    %316 = vmatpush1.msra.mxu0 %v78
    %317 = vmatprep.subr.mxu0 %v76
    %318 = vmatpush1.msra.mxu0 %v75
    %319 = vmatprep.subr.mxu0 %v73
    %320 = vmatpush1.msra.mxu0 %v72
    %321 = vmatprep.subr.mxu0 %v70
    %322 = vmatpush1.msra.mxu0 %v69
    %323 = vmatprep.subr.mxu0 %v67
    %324 = vmatpush1.msra.mxu0 %v66
    %325 = vmatprep.subr.mxu0 %v64
    %326 = vmatpush1.msra.mxu0 %v63
    %327 = vmatprep.subr.mxu0 %v61
    %328 = vmatpush1.msra.mxu0 %v60
    %329 = vmatprep.subr.mxu0 %v58
    %330 = vmatpush1.msra.mxu0 %v57
    %331 = vmatprep.subr.mxu0 %v55
    %332 = vmatpush1.msra.mxu0 %v54
    %333 = vmatprep.subr.mxu0 0.0
    %334 = vmatpush2.msra.mxu0 0.0
    %335 = vmatprep.subr.mxu0 0.0
    %336 = vmatpush2.msra.mxu0 0.0
    %337 = vmatprep.subr.mxu0 0.0
    %338 = vmatpush2.msra.mxu0 0.0
    %339 = vmatprep.subr.mxu0 0.0
    %340 = vmatpush2.msra.mxu0 0.0
    %341 = vmatprep.subr.mxu0 0.0
    %342 = vmatpush2.msra.mxu0 0.0
    %343 = vmatprep.subr.mxu0 0.0
    %344 = vmatpush2.msra.mxu0 0.0
    %345 = vmatprep.subr.mxu0 0.0
    %346 = vmatpush2.msra.mxu0 0.0
    %347 = vmatprep.subr.mxu0 0.0
    %348 = vmatpush2.msra.mxu0 0.0
    %349 = vmatprep.subr.mxu0 0.0
    %350 = vmatpush2.msra.mxu0 0.0
    %351 = vmatprep.subr.mxu0 0.0
    %352 = vmatpush2.msra.mxu0 0.0
    %353 = vmatprep.subr.mxu0 0.0
    %354 = vmatpush2.msra.mxu0 0.0
    %355 = vmatprep.subr.mxu0 0.0
    %356 = vmatpush2.msra.mxu0 0.0
    %357 = vmatprep.subr.mxu0 0.0
    %358 = vmatpush2.msra.mxu0 0.0
    %359 = vmatprep.subr.mxu0 0.0
    %360 = vmatpush2.msra.mxu0 0.0
    %361 = vmatprep.subr.mxu0 0.0
    %362 = vmatpush2.msra.mxu0 0.0
    %363 = vmatprep.subr.mxu0 0.0
    %364 = vmatpush2.msra.mxu0 0.0
    %365 = vmatprep.mubr.f32.mxu0 0.0
    %366 = vmatmul.mubr.f32.gmra.mxu0 %v296
    %v367 = vpop.f32.mrf.mxu0
    %v368 = vadd.f32 %v113, %v367
    %v369 = vpop.f32.mrf.mxu0
    %v370 = vadd.f32 %v117, %v369
    %371 = vdwg.mxu0
    %372 = vmatprep.subr.mxu0 0.0
    %373 = vmatpush1.msra.mxu0 %v101
    %374 = vmatprep.subr.mxu0 0.0
    %375 = vmatpush1.msra.mxu0 %v98
    %376 = vmatprep.subr.mxu0 0.0
    %377 = vmatpush1.msra.mxu0 %v95
    %378 = vmatprep.subr.mxu0 0.0
    %379 = vmatpush1.msra.mxu0 %v92
    %380 = vmatprep.subr.mxu0 0.0
    %381 = vmatpush1.msra.mxu0 %v89
    %382 = vmatprep.subr.mxu0 0.0
    %383 = vmatpush1.msra.mxu0 %v86
    %384 = vmatprep.subr.mxu0 0.0
    %385 = vmatpush1.msra.mxu0 %v83
    %386 = vmatprep.subr.mxu0 0.0
    %387 = vmatpush1.msra.mxu0 %v80
    %388 = vmatprep.subr.mxu0 0.0
    %389 = vmatpush1.msra.mxu0 %v77
    %390 = vmatprep.subr.mxu0 0.0
    %391 = vmatpush1.msra.mxu0 %v74
    %392 = vmatprep.subr.mxu0 0.0
    %393 = vmatpush1.msra.mxu0 %v71
    %394 = vmatprep.subr.mxu0 0.0
    %395 = vmatpush1.msra.mxu0 %v68
    %396 = vmatprep.subr.mxu0 0.0
    %397 = vmatpush1.msra.mxu0 %v65
    %398 = vmatprep.subr.mxu0 0.0
    %399 = vmatpush1.msra.mxu0 %v62
    %400 = vmatprep.subr.mxu0 0.0
    %401 = vmatpush1.msra.mxu0 %v59
    %402 = vmatprep.subr.mxu0 0.0
    %403 = vmatpush1.msra.mxu0 %v56
    %404 = vmatprep.subr.mxu0 0.0
    %405 = vmatpush2.msra.mxu0 0.0
    %406 = vmatprep.subr.mxu0 0.0
    %407 = vmatpush2.msra.mxu0 0.0
    %408 = vmatprep.subr.mxu0 0.0
    %409 = vmatpush2.msra.mxu0 0.0
    %410 = vmatprep.subr.mxu0 0.0
    %411 = vmatpush2.msra.mxu0 0.0
    %412 = vmatprep.subr.mxu0 0.0
    %413 = vmatpush2.msra.mxu0 0.0
    %414 = vmatprep.subr.mxu0 0.0
    %415 = vmatpush2.msra.mxu0 0.0
    %416 = vmatprep.subr.mxu0 0.0
    %417 = vmatpush2.msra.mxu0 0.0
    %418 = vmatprep.subr.mxu0 0.0
    %419 = vmatpush2.msra.mxu0 0.0
    %420 = vmatprep.subr.mxu0 0.0
    %421 = vmatpush2.msra.mxu0 0.0
    %422 = vmatprep.subr.mxu0 0.0
    %423 = vmatpush2.msra.mxu0 0.0
    %424 = vmatprep.subr.mxu0 0.0
    %425 = vmatpush2.msra.mxu0 0.0
    %426 = vmatprep.subr.mxu0 0.0
    %427 = vmatpush2.msra.mxu0 0.0
    %428 = vmatprep.subr.mxu0 0.0
    %429 = vmatpush2.msra.mxu0 0.0
    %430 = vmatprep.subr.mxu0 0.0
    %431 = vmatpush2.msra.mxu0 0.0
    %432 = vmatprep.subr.mxu0 0.0
    %433 = vmatpush2.msra.mxu0 0.0
    %434 = vmatprep.subr.mxu0 0.0
    %435 = vmatpush2.msra.mxu0 0.0
    %436 = vmatprep.mubr.f32.mxu0 0.0
    %437 = vmatmul.mubr.f32.gmra.mxu0 %v296
    %v438 = vpop.f32.mrf.mxu0
    %v439 = vadd.f32 %v121, %v438
    %v440 = vpop.f32.mrf.mxu0
    %441 = vdwg.mxu0
    %v442 = vadd.f32 %v298, %v368
    %v443 = vxor.u32 %v442, 2147483648
    %v444 = vmul.f32 %v443, 1.442695
    %v445 = vpow.pop %v444
    %v446 = vadd.f32 %v445, 1.0
    %v447 = vrcp.pop %v446
    %v448 = vmul.f32 1.0, %v447
    %v449 = vadd.f32 %v299, %v370
    %v450 = vxor.u32 %v449, 2147483648
    %v451 = vmul.f32 %v450, 1.442695
    %v452 = vpow.pop %v451
    %v453 = vadd.f32 %v452, 1.0
    %v454 = vrcp.pop %v453
    %v455 = vmul.f32 1.0, %v454
    %v456 = vmul.f32 %v448, %v439
    %v457 = vadd.f32 %v300, %v456
    %v458 = vtanh.pop %v457
    %v459 = vsub.f32 1.0, %v455
    %v460 = vmul.f32 %v459, %v458
    %v461 = vmul.f32 %v455, %v296
    %v462 = vadd.f32 %v460, %v461
    %s463 = sadd.s32 %s104, 1
    %v464 = vstv %s463
    %vm465 = vcmp.gt.s32.totalorder %v103, %v464
    %v466 = vsel %vm465, 1, 0
    %467 = vset.pattern.permute.xlu0 0
    %468 = vperm.xlu0 %467, %v466
    %v469 = vpop.permute.xlu0 %468
    %vm470 = vcmp.eq.s32.totalorder %v469, 1
    %v471 = vsel %vm470, %v462, 0.0
    %s472 = scalar_lea.vmem [#allocation7], 8
    %473 = vst [vmem:[%s472] sm:$0xff] %v471
    %v474 = vsel %vm470, %v462, %v296
    %s475 = scalar_lea.vmem [#allocation2], 48
    %v476 = vld [vmem:[%s475] sm:$0xff]
    %v477 = vld [vmem:[%s475 + $0x8] sm:$0xff]
    %v478 = vld [vmem:[%s475 + $0x10] sm:$0xff]
    %479 = vmatprep.subr.mxu0 %v100
    %480 = vmatpush1.msra.mxu0 %v99
    %481 = vmatprep.subr.mxu0 %v97
    %482 = vmatpush1.msra.mxu0 %v96
    %483 = vmatprep.subr.mxu0 %v94
    %484 = vmatpush1.msra.mxu0 %v93
    %485 = vmatprep.subr.mxu0 %v91
    %486 = vmatpush1.msra.mxu0 %v90
    %487 = vmatprep.subr.mxu0 %v88
    %488 = vmatpush1.msra.mxu0 %v87
    %489 = vmatprep.subr.mxu0 %v85
    %490 = vmatpush1.msra.mxu0 %v84
    %491 = vmatprep.subr.mxu0 %v82
    %492 = vmatpush1.msra.mxu0 %v81
    %493 = vmatprep.subr.mxu0 %v79
    %494 = vmatpush1.msra.mxu0 %v78
    %495 = vmatprep.subr.mxu0 %v76
    %496 = vmatpush1.msra.mxu0 %v75
    %497 = vmatprep.subr.mxu0 %v73
    %498 = vmatpush1.msra.mxu0 %v72
    %499 = vmatprep.subr.mxu0 %v70
    %500 = vmatpush1.msra.mxu0 %v69
    %501 = vmatprep.subr.mxu0 %v67
    %502 = vmatpush1.msra.mxu0 %v66
    %503 = vmatprep.subr.mxu0 %v64
    %504 = vmatpush1.msra.mxu0 %v63
    %505 = vmatprep.subr.mxu0 %v61
    %506 = vmatpush1.msra.mxu0 %v60
    %507 = vmatprep.subr.mxu0 %v58
    %508 = vmatpush1.msra.mxu0 %v57
    %509 = vmatprep.subr.mxu0 %v55
    %510 = vmatpush1.msra.mxu0 %v54
    %511 = vmatprep.subr.mxu0 0.0
    %512 = vmatpush2.msra.mxu0 0.0
    %513 = vmatprep.subr.mxu0 0.0
    %514 = vmatpush2.msra.mxu0 0.0
    %515 = vmatprep.subr.mxu0 0.0
    %516 = vmatpush2.msra.mxu0 0.0
    %517 = vmatprep.subr.mxu0 0.0
    %518 = vmatpush2.msra.mxu0 0.0
    %519 = vmatprep.subr.mxu0 0.0
    %520 = vmatpush2.msra.mxu0 0.0
    %521 = vmatprep.subr.mxu0 0.0
    %522 = vmatpush2.msra.mxu0 0.0
    %523 = vmatprep.subr.mxu0 0.0
    %524 = vmatpush2.msra.mxu0 0.0
    %525 = vmatprep.subr.mxu0 0.0
    %526 = vmatpush2.msra.mxu0 0.0
    %527 = vmatprep.subr.mxu0 0.0
    %528 = vmatpush2.msra.mxu0 0.0
    %529 = vmatprep.subr.mxu0 0.0
    %530 = vmatpush2.msra.mxu0 0.0
    %531 = vmatprep.subr.mxu0 0.0
    %532 = vmatpush2.msra.mxu0 0.0
    %533 = vmatprep.subr.mxu0 0.0
    %534 = vmatpush2.msra.mxu0 0.0
    %535 = vmatprep.subr.mxu0 0.0
    %536 = vmatpush2.msra.mxu0 0.0
    %537 = vmatprep.subr.mxu0 0.0
    %538 = vmatpush2.msra.mxu0 0.0
    %539 = vmatprep.subr.mxu0 0.0
    %540 = vmatpush2.msra.mxu0 0.0
    %541 = vmatprep.subr.mxu0 0.0
    %542 = vmatpush2.msra.mxu0 0.0
    %543 = vmatprep.mubr.f32.mxu0 0.0
    %544 = vmatmul.mubr.f32.gmra.mxu0 %v474
    %v545 = vpop.f32.mrf.mxu0
    %v546 = vadd.f32 %v113, %v545
    %v547 = vpop.f32.mrf.mxu0
    %v548 = vadd.f32 %v117, %v547
    %549 = vdwg.mxu0
    %550 = vmatprep.subr.mxu0 0.0
    %551 = vmatpush1.msra.mxu0 %v101
    %552 = vmatprep.subr.mxu0 0.0
    %553 = vmatpush1.msra.mxu0 %v98
    %554 = vmatprep.subr.mxu0 0.0
    %555 = vmatpush1.msra.mxu0 %v95
    %556 = vmatprep.subr.mxu0 0.0
    %557 = vmatpush1.msra.mxu0 %v92
    %558 = vmatprep.subr.mxu0 0.0
    %559 = vmatpush1.msra.mxu0 %v89
    %560 = vmatprep.subr.mxu0 0.0
    %561 = vmatpush1.msra.mxu0 %v86
    %562 = vmatprep.subr.mxu0 0.0
    %563 = vmatpush1.msra.mxu0 %v83
    %564 = vmatprep.subr.mxu0 0.0
    %565 = vmatpush1.msra.mxu0 %v80
    %566 = vmatprep.subr.mxu0 0.0
    %567 = vmatpush1.msra.mxu0 %v77
    %568 = vmatprep.subr.mxu0 0.0
    %569 = vmatpush1.msra.mxu0 %v74
    %570 = vmatprep.subr.mxu0 0.0
    %571 = vmatpush1.msra.mxu0 %v71
    %572 = vmatprep.subr.mxu0 0.0
    %573 = vmatpush1.msra.mxu0 %v68
    %574 = vmatprep.subr.mxu0 0.0
    %575 = vmatpush1.msra.mxu0 %v65
    %576 = vmatprep.subr.mxu0 0.0
    %577 = vmatpush1.msra.mxu0 %v62
    %578 = vmatprep.subr.mxu0 0.0
    %579 = vmatpush1.msra.mxu0 %v59
    %580 = vmatprep.subr.mxu0 0.0
    %581 = vmatpush1.msra.mxu0 %v56
    %582 = vmatprep.subr.mxu0 0.0
    %583 = vmatpush2.msra.mxu0 0.0
    %584 = vmatprep.subr.mxu0 0.0
    %585 = vmatpush2.msra.mxu0 0.0
    %586 = vmatprep.subr.mxu0 0.0
    %587 = vmatpush2.msra.mxu0 0.0
    %588 = vmatprep.subr.mxu0 0.0
    %589 = vmatpush2.msra.mxu0 0.0
    %590 = vmatprep.subr.mxu0 0.0
    %591 = vmatpush2.msra.mxu0 0.0
    %592 = vmatprep.subr.mxu0 0.0
    %593 = vmatpush2.msra.mxu0 0.0
    %594 = vmatprep.subr.mxu0 0.0
    %595 = vmatpush2.msra.mxu0 0.0
    %596 = vmatprep.subr.mxu0 0.0
    %597 = vmatpush2.msra.mxu0 0.0
    %598 = vmatprep.subr.mxu0 0.0
    %599 = vmatpush2.msra.mxu0 0.0
    %600 = vmatprep.subr.mxu0 0.0
    %601 = vmatpush2.msra.mxu0 0.0
    %602 = vmatprep.subr.mxu0 0.0
    %603 = vmatpush2.msra.mxu0 0.0
    %604 = vmatprep.subr.mxu0 0.0
    %605 = vmatpush2.msra.mxu0 0.0
    %606 = vmatprep.subr.mxu0 0.0
    %607 = vmatpush2.msra.mxu0 0.0
    %608 = vmatprep.subr.mxu0 0.0
    %609 = vmatpush2.msra.mxu0 0.0
    %610 = vmatprep.subr.mxu0 0.0
    %611 = vmatpush2.msra.mxu0 0.0
    %612 = vmatprep.subr.mxu0 0.0
    %613 = vmatpush2.msra.mxu0 0.0
    %614 = vmatprep.mubr.f32.mxu0 0.0
    %615 = vmatmul.mubr.f32.gmra.mxu0 %v474
    %v616 = vpop.f32.mrf.mxu0
    %v617 = vadd.f32 %v121, %v616
    %v618 = vpop.f32.mrf.mxu0
    %619 = vdwg.mxu0
    %v620 = vadd.f32 %v476, %v546
    %v621 = vxor.u32 %v620, 2147483648
    %v622 = vmul.f32 %v621, 1.442695
    %v623 = vpow.pop %v622
    %v624 = vadd.f32 %v623, 1.0
    %v625 = vrcp.pop %v624
    %v626 = vmul.f32 1.0, %v625
    %v627 = vadd.f32 %v477, %v548
    %v628 = vxor.u32 %v627, 2147483648
    %v629 = vmul.f32 %v628, 1.442695
    %v630 = vpow.pop %v629
    %v631 = vadd.f32 %v630, 1.0
    %v632 = vrcp.pop %v631
    %v633 = vmul.f32 1.0, %v632
    %v634 = vmul.f32 %v626, %v617
    %v635 = vadd.f32 %v478, %v634
    %v636 = vtanh.pop %v635
    %v637 = vsub.f32 1.0, %v633
    %v638 = vmul.f32 %v637, %v636
    %v639 = vmul.f32 %v633, %v474
    %v640 = vadd.f32 %v638, %v639
    %s641 = sadd.s32 %s104, 2
    %v642 = vstv %s641
    %vm643 = vcmp.gt.s32.totalorder %v103, %v642
    %v644 = vsel %vm643, 1, 0
    %645 = vset.pattern.permute.xlu0 0
    %646 = vperm.xlu0 %645, %v644
    %v647 = vpop.permute.xlu0 %646
    %vm648 = vcmp.eq.s32.totalorder %v647, 1
    %v649 = vsel %vm648, %v640, 0.0
    %s650 = scalar_lea.vmem [#allocation7], 16
    %651 = vst [vmem:[%s650] sm:$0xff] %v649
    %v652 = vsel %vm648, %v640, %v474
    %s653 = scalar_lea.vmem [#allocation2], 72
    %v654 = vld [vmem:[%s653] sm:$0xff]
    %v655 = vld [vmem:[%s653 + $0x8] sm:$0xff]
    %v656 = vld [vmem:[%s653 + $0x10] sm:$0xff]
    %657 = vmatprep.subr.mxu0 %v100
    %658 = vmatpush1.msra.mxu0 %v99
    %659 = vmatprep.subr.mxu0 %v97
    %660 = vmatpush1.msra.mxu0 %v96
    %661 = vmatprep.subr.mxu0 %v94
    %662 = vmatpush1.msra.mxu0 %v93
    %663 = vmatprep.subr.mxu0 %v91
    %664 = vmatpush1.msra.mxu0 %v90
    %665 = vmatprep.subr.mxu0 %v88
    %666 = vmatpush1.msra.mxu0 %v87
    %667 = vmatprep.subr.mxu0 %v85
    %668 = vmatpush1.msra.mxu0 %v84
    %669 = vmatprep.subr.mxu0 %v82
    %670 = vmatpush1.msra.mxu0 %v81
    %671 = vmatprep.subr.mxu0 %v79
    %672 = vmatpush1.msra.mxu0 %v78
    %673 = vmatprep.subr.mxu0 %v76
    %674 = vmatpush1.msra.mxu0 %v75
    %675 = vmatprep.subr.mxu0 %v73
    %676 = vmatpush1.msra.mxu0 %v72
    %677 = vmatprep.subr.mxu0 %v70
    %678 = vmatpush1.msra.mxu0 %v69
    %679 = vmatprep.subr.mxu0 %v67
    %680 = vmatpush1.msra.mxu0 %v66
    %681 = vmatprep.subr.mxu0 %v64
    %682 = vmatpush1.msra.mxu0 %v63
    %683 = vmatprep.subr.mxu0 %v61
    %684 = vmatpush1.msra.mxu0 %v60
    %685 = vmatprep.subr.mxu0 %v58
    %686 = vmatpush1.msra.mxu0 %v57
    %687 = vmatprep.subr.mxu0 %v55
    %688 = vmatpush1.msra.mxu0 %v54
    %689 = vmatprep.subr.mxu0 0.0
    %690 = vmatpush2.msra.mxu0 0.0
    %691 = vmatprep.subr.mxu0 0.0
    %692 = vmatpush2.msra.mxu0 0.0
    %693 = vmatprep.subr.mxu0 0.0
    %694 = vmatpush2.msra.mxu0 0.0
    %695 = vmatprep.subr.mxu0 0.0
    %696 = vmatpush2.msra.mxu0 0.0
    %697 = vmatprep.subr.mxu0 0.0
    %698 = vmatpush2.msra.mxu0 0.0
    %699 = vmatprep.subr.mxu0 0.0
    %700 = vmatpush2.msra.mxu0 0.0
    %701 = vmatprep.subr.mxu0 0.0
    %702 = vmatpush2.msra.mxu0 0.0
    %703 = vmatprep.subr.mxu0 0.0
    %704 = vmatpush2.msra.mxu0 0.0
    %705 = vmatprep.subr.mxu0 0.0
    %706 = vmatpush2.msra.mxu0 0.0
    %707 = vmatprep.subr.mxu0 0.0
    %708 = vmatpush2.msra.mxu0 0.0
    %709 = vmatprep.subr.mxu0 0.0
    %710 = vmatpush2.msra.mxu0 0.0
    %711 = vmatprep.subr.mxu0 0.0
    %712 = vmatpush2.msra.mxu0 0.0
    %713 = vmatprep.subr.mxu0 0.0
    %714 = vmatpush2.msra.mxu0 0.0
    %715 = vmatprep.subr.mxu0 0.0
    %716 = vmatpush2.msra.mxu0 0.0
    %717 = vmatprep.subr.mxu0 0.0
    %718 = vmatpush2.msra.mxu0 0.0
    %719 = vmatprep.subr.mxu0 0.0
    %720 = vmatpush2.msra.mxu0 0.0
    %721 = vmatprep.mubr.f32.mxu0 0.0
    %722 = vmatmul.mubr.f32.gmra.mxu0 %v652
    %v723 = vpop.f32.mrf.mxu0
    %v724 = vadd.f32 %v113, %v723
    %v725 = vpop.f32.mrf.mxu0
    %v726 = vadd.f32 %v117, %v725
    %727 = vdwg.mxu0
    %728 = vmatprep.subr.mxu0 0.0
    %729 = vmatpush1.msra.mxu0 %v101
    %730 = vmatprep.subr.mxu0 0.0
    %731 = vmatpush1.msra.mxu0 %v98
    %732 = vmatprep.subr.mxu0 0.0
    %733 = vmatpush1.msra.mxu0 %v95
    %734 = vmatprep.subr.mxu0 0.0
    %735 = vmatpush1.msra.mxu0 %v92
    %736 = vmatprep.subr.mxu0 0.0
    %737 = vmatpush1.msra.mxu0 %v89
    %738 = vmatprep.subr.mxu0 0.0
    %739 = vmatpush1.msra.mxu0 %v86
    %740 = vmatprep.subr.mxu0 0.0
    %741 = vmatpush1.msra.mxu0 %v83
    %742 = vmatprep.subr.mxu0 0.0
    %743 = vmatpush1.msra.mxu0 %v80
    %744 = vmatprep.subr.mxu0 0.0
    %745 = vmatpush1.msra.mxu0 %v77
    %746 = vmatprep.subr.mxu0 0.0
    %747 = vmatpush1.msra.mxu0 %v74
    %748 = vmatprep.subr.mxu0 0.0
    %749 = vmatpush1.msra.mxu0 %v71
    %750 = vmatprep.subr.mxu0 0.0
    %751 = vmatpush1.msra.mxu0 %v68
    %752 = vmatprep.subr.mxu0 0.0
    %753 = vmatpush1.msra.mxu0 %v65
    %754 = vmatprep.subr.mxu0 0.0
    %755 = vmatpush1.msra.mxu0 %v62
    %756 = vmatprep.subr.mxu0 0.0
    %757 = vmatpush1.msra.mxu0 %v59
    %758 = vmatprep.subr.mxu0 0.0
    %759 = vmatpush1.msra.mxu0 %v56
    %760 = vmatprep.subr.mxu0 0.0
    %761 = vmatpush2.msra.mxu0 0.0
    %762 = vmatprep.subr.mxu0 0.0
    %763 = vmatpush2.msra.mxu0 0.0
    %764 = vmatprep.subr.mxu0 0.0
    %765 = vmatpush2.msra.mxu0 0.0
    %766 = vmatprep.subr.mxu0 0.0
    %767 = vmatpush2.msra.mxu0 0.0
    %768 = vmatprep.subr.mxu0 0.0
    %769 = vmatpush2.msra.mxu0 0.0
    %770 = vmatprep.subr.mxu0 0.0
    %771 = vmatpush2.msra.mxu0 0.0
    %772 = vmatprep.subr.mxu0 0.0
    %773 = vmatpush2.msra.mxu0 0.0
    %774 = vmatprep.subr.mxu0 0.0
    %775 = vmatpush2.msra.mxu0 0.0
    %776 = vmatprep.subr.mxu0 0.0
    %777 = vmatpush2.msra.mxu0 0.0
    %778 = vmatprep.subr.mxu0 0.0
    %779 = vmatpush2.msra.mxu0 0.0
    %780 = vmatprep.subr.mxu0 0.0
    %781 = vmatpush2.msra.mxu0 0.0
    %782 = vmatprep.subr.mxu0 0.0
    %783 = vmatpush2.msra.mxu0 0.0
    %784 = vmatprep.subr.mxu0 0.0
    %785 = vmatpush2.msra.mxu0 0.0
    %786 = vmatprep.subr.mxu0 0.0
    %787 = vmatpush2.msra.mxu0 0.0
    %788 = vmatprep.subr.mxu0 0.0
    %789 = vmatpush2.msra.mxu0 0.0
    %790 = vmatprep.subr.mxu0 0.0
    %791 = vmatpush2.msra.mxu0 0.0
    %792 = vmatprep.mubr.f32.mxu0 0.0
    %793 = vmatmul.mubr.f32.gmra.mxu0 %v652
    %v794 = vpop.f32.mrf.mxu0
    %v795 = vadd.f32 %v121, %v794
    %v796 = vpop.f32.mrf.mxu0
    %797 = vdwg.mxu0
    %v798 = vadd.f32 %v654, %v724
    %v799 = vxor.u32 %v798, 2147483648
    %v800 = vmul.f32 %v799, 1.442695
    %v801 = vpow.pop %v800
    %v802 = vadd.f32 %v801, 1.0
    %v803 = vrcp.pop %v802
    %v804 = vmul.f32 1.0, %v803
    %v805 = vadd.f32 %v655, %v726
    %v806 = vxor.u32 %v805, 2147483648
    %v807 = vmul.f32 %v806, 1.442695
    %v808 = vpow.pop %v807
    %v809 = vadd.f32 %v808, 1.0
    %v810 = vrcp.pop %v809
    %v811 = vmul.f32 1.0, %v810
    %v812 = vmul.f32 %v804, %v795
    %v813 = vadd.f32 %v656, %v812
    %v814 = vtanh.pop %v813
    %v815 = vsub.f32 1.0, %v811
    %v816 = vmul.f32 %v815, %v814
    %v817 = vmul.f32 %v811, %v652
    %v818 = vadd.f32 %v816, %v817
    %s819 = sadd.s32 %s104, 3
    %v820 = vstv %s819
    %vm821 = vcmp.gt.s32.totalorder %v103, %v820
    %v822 = vsel %vm821, 1, 0
    %823 = vset.pattern.permute.xlu0 0
    %824 = vperm.xlu0 %823, %v822
    %v825 = vpop.permute.xlu0 %824
    %vm826 = vcmp.eq.s32.totalorder %v825, 1
    %v827 = vsel %vm826, %v818, 0.0
    %s828 = scalar_lea.vmem [#allocation7], 24
    %829 = vst [vmem:[%s828] sm:$0xff] %v827
    %v830 = vsel %vm826, %v818, %v652
    %s831 = scalar_lea.vmem [#allocation2], 96
    %v832 = vld [vmem:[%s831] sm:$0xff]
    %v833 = vld [vmem:[%s831 + $0x8] sm:$0xff]
    %v834 = vld [vmem:[%s831 + $0x10] sm:$0xff]
    %835 = vmatprep.subr.mxu0 %v100
    %836 = vmatpush1.msra.mxu0 %v99
    %837 = vmatprep.subr.mxu0 %v97
    %838 = vmatpush1.msra.mxu0 %v96
    %839 = vmatprep.subr.mxu0 %v94
    %840 = vmatpush1.msra.mxu0 %v93
    %841 = vmatprep.subr.mxu0 %v91
    %842 = vmatpush1.msra.mxu0 %v90
    %843 = vmatprep.subr.mxu0 %v88
    %844 = vmatpush1.msra.mxu0 %v87
    %845 = vmatprep.subr.mxu0 %v85
    %846 = vmatpush1.msra.mxu0 %v84
    %847 = vmatprep.subr.mxu0 %v82
    %848 = vmatpush1.msra.mxu0 %v81
    %849 = vmatprep.subr.mxu0 %v79
    %850 = vmatpush1.msra.mxu0 %v78
    %851 = vmatprep.subr.mxu0 %v76
    %852 = vmatpush1.msra.mxu0 %v75
    %853 = vmatprep.subr.mxu0 %v73
    %854 = vmatpush1.msra.mxu0 %v72
    %855 = vmatprep.subr.mxu0 %v70
    %856 = vmatpush1.msra.mxu0 %v69
    %857 = vmatprep.subr.mxu0 %v67
    %858 = vmatpush1.msra.mxu0 %v66
    %859 = vmatprep.subr.mxu0 %v64
    %860 = vmatpush1.msra.mxu0 %v63
    %861 = vmatprep.subr.mxu0 %v61
    %862 = vmatpush1.msra.mxu0 %v60
    %863 = vmatprep.subr.mxu0 %v58
    %864 = vmatpush1.msra.mxu0 %v57
    %865 = vmatprep.subr.mxu0 %v55
    %866 = vmatpush1.msra.mxu0 %v54
    %867 = vmatprep.subr.mxu0 0.0
    %868 = vmatpush2.msra.mxu0 0.0
    %869 = vmatprep.subr.mxu0 0.0
    %870 = vmatpush2.msra.mxu0 0.0
    %871 = vmatprep.subr.mxu0 0.0
    %872 = vmatpush2.msra.mxu0 0.0
    %873 = vmatprep.subr.mxu0 0.0
    %874 = vmatpush2.msra.mxu0 0.0
    %875 = vmatprep.subr.mxu0 0.0
    %876 = vmatpush2.msra.mxu0 0.0
    %877 = vmatprep.subr.mxu0 0.0
    %878 = vmatpush2.msra.mxu0 0.0
    %879 = vmatprep.subr.mxu0 0.0
    %880 = vmatpush2.msra.mxu0 0.0
    %881 = vmatprep.subr.mxu0 0.0
    %882 = vmatpush2.msra.mxu0 0.0
    %883 = vmatprep.subr.mxu0 0.0
    %884 = vmatpush2.msra.mxu0 0.0
    %885 = vmatprep.subr.mxu0 0.0
    %886 = vmatpush2.msra.mxu0 0.0
    %887 = vmatprep.subr.mxu0 0.0
    %888 = vmatpush2.msra.mxu0 0.0
    %889 = vmatprep.subr.mxu0 0.0
    %890 = vmatpush2.msra.mxu0 0.0
    %891 = vmatprep.subr.mxu0 0.0
    %892 = vmatpush2.msra.mxu0 0.0
    %893 = vmatprep.subr.mxu0 0.0
    %894 = vmatpush2.msra.mxu0 0.0
    %895 = vmatprep.subr.mxu0 0.0
    %896 = vmatpush2.msra.mxu0 0.0
    %897 = vmatprep.subr.mxu0 0.0
    %898 = vmatpush2.msra.mxu0 0.0
    %899 = vmatprep.mubr.f32.mxu0 0.0
    %900 = vmatmul.mubr.f32.gmra.mxu0 %v830
    %v901 = vpop.f32.mrf.mxu0
    %v902 = vadd.f32 %v113, %v901
    %v903 = vpop.f32.mrf.mxu0
    %v904 = vadd.f32 %v117, %v903
    %905 = vdwg.mxu0
    %906 = vmatprep.subr.mxu0 0.0
    %907 = vmatpush1.msra.mxu0 %v101
    %908 = vmatprep.subr.mxu0 0.0
    %909 = vmatpush1.msra.mxu0 %v98
    %910 = vmatprep.subr.mxu0 0.0
    %911 = vmatpush1.msra.mxu0 %v95
    %912 = vmatprep.subr.mxu0 0.0
    %913 = vmatpush1.msra.mxu0 %v92
    %914 = vmatprep.subr.mxu0 0.0
    %915 = vmatpush1.msra.mxu0 %v89
    %916 = vmatprep.subr.mxu0 0.0
    %917 = vmatpush1.msra.mxu0 %v86
    %918 = vmatprep.subr.mxu0 0.0
    %919 = vmatpush1.msra.mxu0 %v83
    %920 = vmatprep.subr.mxu0 0.0
    %921 = vmatpush1.msra.mxu0 %v80
    %922 = vmatprep.subr.mxu0 0.0
    %923 = vmatpush1.msra.mxu0 %v77
    %924 = vmatprep.subr.mxu0 0.0
    %925 = vmatpush1.msra.mxu0 %v74
    %926 = vmatprep.subr.mxu0 0.0
    %927 = vmatpush1.msra.mxu0 %v71
    %928 = vmatprep.subr.mxu0 0.0
    %929 = vmatpush1.msra.mxu0 %v68
    %930 = vmatprep.subr.mxu0 0.0
    %931 = vmatpush1.msra.mxu0 %v65
    %932 = vmatprep.subr.mxu0 0.0
    %933 = vmatpush1.msra.mxu0 %v62
    %934 = vmatprep.subr.mxu0 0.0
    %935 = vmatpush1.msra.mxu0 %v59
    %936 = vmatprep.subr.mxu0 0.0
    %937 = vmatpush1.msra.mxu0 %v56
    %938 = vmatprep.subr.mxu0 0.0
    %939 = vmatpush2.msra.mxu0 0.0
    %940 = vmatprep.subr.mxu0 0.0
    %941 = vmatpush2.msra.mxu0 0.0
    %942 = vmatprep.subr.mxu0 0.0
    %943 = vmatpush2.msra.mxu0 0.0
    %944 = vmatprep.subr.mxu0 0.0
    %945 = vmatpush2.msra.mxu0 0.0
    %946 = vmatprep.subr.mxu0 0.0
    %947 = vmatpush2.msra.mxu0 0.0
    %948 = vmatprep.subr.mxu0 0.0
    %949 = vmatpush2.msra.mxu0 0.0
    %950 = vmatprep.subr.mxu0 0.0
    %951 = vmatpush2.msra.mxu0 0.0
    %952 = vmatprep.subr.mxu0 0.0
    %953 = vmatpush2.msra.mxu0 0.0
    %954 = vmatprep.subr.mxu0 0.0
    %955 = vmatpush2.msra.mxu0 0.0
    %956 = vmatprep.subr.mxu0 0.0
    %957 = vmatpush2.msra.mxu0 0.0
    %958 = vmatprep.subr.mxu0 0.0
    %959 = vmatpush2.msra.mxu0 0.0
    %960 = vmatprep.subr.mxu0 0.0
    %961 = vmatpush2.msra.mxu0 0.0
    %962 = vmatprep.subr.mxu0 0.0
    %963 = vmatpush2.msra.mxu0 0.0
    %964 = vmatprep.subr.mxu0 0.0
    %965 = vmatpush2.msra.mxu0 0.0
    %966 = vmatprep.subr.mxu0 0.0
    %967 = vmatpush2.msra.mxu0 0.0
    %968 = vmatprep.subr.mxu0 0.0
    %969 = vmatpush2.msra.mxu0 0.0
    %970 = vmatprep.mubr.f32.mxu0 0.0
    %971 = vmatmul.mubr.f32.gmra.mxu0 %v830
    %v972 = vpop.f32.mrf.mxu0
    %v973 = vadd.f32 %v121, %v972
    %v974 = vpop.f32.mrf.mxu0
    %975 = vdwg.mxu0
    %v976 = vadd.f32 %v832, %v902
    %v977 = vxor.u32 %v976, 2147483648
    %v978 = vmul.f32 %v977, 1.442695
    %v979 = vpow.pop %v978
    %v980 = vadd.f32 %v979, 1.0
    %v981 = vrcp.pop %v980
    %v982 = vmul.f32 1.0, %v981
    %v983 = vadd.f32 %v833, %v904
    %v984 = vxor.u32 %v983, 2147483648
    %v985 = vmul.f32 %v984, 1.442695
    %v986 = vpow.pop %v985
    %v987 = vadd.f32 %v986, 1.0
    %v988 = vrcp.pop %v987
    %v989 = vmul.f32 1.0, %v988
    %v990 = vmul.f32 %v982, %v973
    %v991 = vadd.f32 %v834, %v990
    %v992 = vtanh.pop %v991
    %v993 = vsub.f32 1.0, %v989
    %v994 = vmul.f32 %v993, %v992
    %v995 = vmul.f32 %v989, %v830
    %v996 = vadd.f32 %v994, %v995
    %s997 = sadd.s32 %s104, 4
    %v998 = vstv %s997
    %vm999 = vcmp.gt.s32.totalorder %v103, %v998
    %v1000 = vsel %vm999, 1, 0
    %1001 = vset.pattern.permute.xlu0 0
    %1002 = vperm.xlu0 %1001, %v1000
    %v1003 = vpop.permute.xlu0 %1002
    %vm1004 = vcmp.eq.s32.totalorder %v1003, 1
    %v1005 = vsel %vm1004, %v996, 0.0
    %s1006 = scalar_lea.vmem [#allocation7], 32
    %1007 = vst [vmem:[%s1006] sm:$0xff] %v1005
    %v1008 = vsel %vm1004, %v996, %v830
    %s1009 = scalar_lea.vmem [#allocation2], 120
    %v1010 = vld [vmem:[%s1009] sm:$0xff]
    %v1011 = vld [vmem:[%s1009 + $0x8] sm:$0xff]
    %v1012 = vld [vmem:[%s1009 + $0x10] sm:$0xff]
    %1013 = vmatprep.subr.mxu0 %v100
    %1014 = vmatpush1.msra.mxu0 %v99
    %1015 = vmatprep.subr.mxu0 %v97
    %1016 = vmatpush1.msra.mxu0 %v96
    %1017 = vmatprep.subr.mxu0 %v94
    %1018 = vmatpush1.msra.mxu0 %v93
    %1019 = vmatprep.subr.mxu0 %v91
    %1020 = vmatpush1.msra.mxu0 %v90
    %1021 = vmatprep.subr.mxu0 %v88
    %1022 = vmatpush1.msra.mxu0 %v87
    %1023 = vmatprep.subr.mxu0 %v85
    %1024 = vmatpush1.msra.mxu0 %v84
    %1025 = vmatprep.subr.mxu0 %v82
    %1026 = vmatpush1.msra.mxu0 %v81
    %1027 = vmatprep.subr.mxu0 %v79
    %1028 = vmatpush1.msra.mxu0 %v78
    %1029 = vmatprep.subr.mxu0 %v76
    %1030 = vmatpush1.msra.mxu0 %v75
    %1031 = vmatprep.subr.mxu0 %v73
    %1032 = vmatpush1.msra.mxu0 %v72
    %1033 = vmatprep.subr.mxu0 %v70
    %1034 = vmatpush1.msra.mxu0 %v69
    %1035 = vmatprep.subr.mxu0 %v67
    %1036 = vmatpush1.msra.mxu0 %v66
    %1037 = vmatprep.subr.mxu0 %v64
    %1038 = vmatpush1.msra.mxu0 %v63
    %1039 = vmatprep.subr.mxu0 %v61
    %1040 = vmatpush1.msra.mxu0 %v60
    %1041 = vmatprep.subr.mxu0 %v58
    %1042 = vmatpush1.msra.mxu0 %v57
    %1043 = vmatprep.subr.mxu0 %v55
    %1044 = vmatpush1.msra.mxu0 %v54
    %1045 = vmatprep.subr.mxu0 0.0
    %1046 = vmatpush2.msra.mxu0 0.0
    %1047 = vmatprep.subr.mxu0 0.0
    %1048 = vmatpush2.msra.mxu0 0.0
    %1049 = vmatprep.subr.mxu0 0.0
    %1050 = vmatpush2.msra.mxu0 0.0
    %1051 = vmatprep.subr.mxu0 0.0
    %1052 = vmatpush2.msra.mxu0 0.0
    %1053 = vmatprep.subr.mxu0 0.0
    %1054 = vmatpush2.msra.mxu0 0.0
    %1055 = vmatprep.subr.mxu0 0.0
    %1056 = vmatpush2.msra.mxu0 0.0
    %1057 = vmatprep.subr.mxu0 0.0
    %1058 = vmatpush2.msra.mxu0 0.0
    %1059 = vmatprep.subr.mxu0 0.0
    %1060 = vmatpush2.msra.mxu0 0.0
    %1061 = vmatprep.subr.mxu0 0.0
    %1062 = vmatpush2.msra.mxu0 0.0
    %1063 = vmatprep.subr.mxu0 0.0
    %1064 = vmatpush2.msra.mxu0 0.0
    %1065 = vmatprep.subr.mxu0 0.0
    %1066 = vmatpush2.msra.mxu0 0.0
    %1067 = vmatprep.subr.mxu0 0.0
    %1068 = vmatpush2.msra.mxu0 0.0
    %1069 = vmatprep.subr.mxu0 0.0
    %1070 = vmatpush2.msra.mxu0 0.0
    %1071 = vmatprep.subr.mxu0 0.0
    %1072 = vmatpush2.msra.mxu0 0.0
    %1073 = vmatprep.subr.mxu0 0.0
    %1074 = vmatpush2.msra.mxu0 0.0
    %1075 = vmatprep.subr.mxu0 0.0
    %1076 = vmatpush2.msra.mxu0 0.0
    %1077 = vmatprep.mubr.f32.mxu0 0.0
    %1078 = vmatmul.mubr.f32.gmra.mxu0 %v1008
    %v1079 = vpop.f32.mrf.mxu0
    %v1080 = vadd.f32 %v113, %v1079
    %v1081 = vpop.f32.mrf.mxu0
    %v1082 = vadd.f32 %v117, %v1081
    %1083 = vdwg.mxu0
    %1084 = vmatprep.subr.mxu0 0.0
    %1085 = vmatpush1.msra.mxu0 %v101
    %1086 = vmatprep.subr.mxu0 0.0
    %1087 = vmatpush1.msra.mxu0 %v98
    %1088 = vmatprep.subr.mxu0 0.0
    %1089 = vmatpush1.msra.mxu0 %v95
    %1090 = vmatprep.subr.mxu0 0.0
    %1091 = vmatpush1.msra.mxu0 %v92
    %1092 = vmatprep.subr.mxu0 0.0
    %1093 = vmatpush1.msra.mxu0 %v89
    %1094 = vmatprep.subr.mxu0 0.0
    %1095 = vmatpush1.msra.mxu0 %v86
    %1096 = vmatprep.subr.mxu0 0.0
    %1097 = vmatpush1.msra.mxu0 %v83
    %1098 = vmatprep.subr.mxu0 0.0
    %1099 = vmatpush1.msra.mxu0 %v80
    %1100 = vmatprep.subr.mxu0 0.0
    %1101 = vmatpush1.msra.mxu0 %v77
    %1102 = vmatprep.subr.mxu0 0.0
    %1103 = vmatpush1.msra.mxu0 %v74
    %1104 = vmatprep.subr.mxu0 0.0
    %1105 = vmatpush1.msra.mxu0 %v71
    %1106 = vmatprep.subr.mxu0 0.0
    %1107 = vmatpush1.msra.mxu0 %v68
    %1108 = vmatprep.subr.mxu0 0.0
    %1109 = vmatpush1.msra.mxu0 %v65
    %1110 = vmatprep.subr.mxu0 0.0
    %1111 = vmatpush1.msra.mxu0 %v62
    %1112 = vmatprep.subr.mxu0 0.0
    %1113 = vmatpush1.msra.mxu0 %v59
    %1114 = vmatprep.subr.mxu0 0.0
    %1115 = vmatpush1.msra.mxu0 %v56
    %1116 = vmatprep.subr.mxu0 0.0
    %1117 = vmatpush2.msra.mxu0 0.0
    %1118 = vmatprep.subr.mxu0 0.0
    %1119 = vmatpush2.msra.mxu0 0.0
    %1120 = vmatprep.subr.mxu0 0.0
    %1121 = vmatpush2.msra.mxu0 0.0
    %1122 = vmatprep.subr.mxu0 0.0
    %1123 = vmatpush2.msra.mxu0 0.0
    %1124 = vmatprep.subr.mxu0 0.0
    %1125 = vmatpush2.msra.mxu0 0.0
    %1126 = vmatprep.subr.mxu0 0.0
    %1127 = vmatpush2.msra.mxu0 0.0
    %1128 = vmatprep.subr.mxu0 0.0
    %1129 = vmatpush2.msra.mxu0 0.0
    %1130 = vmatprep.subr.mxu0 0.0
    %1131 = vmatpush2.msra.mxu0 0.0
    %1132 = vmatprep.subr.mxu0 0.0
    %1133 = vmatpush2.msra.mxu0 0.0
    %1134 = vmatprep.subr.mxu0 0.0
    %1135 = vmatpush2.msra.mxu0 0.0
    %1136 = vmatprep.subr.mxu0 0.0
    %1137 = vmatpush2.msra.mxu0 0.0
    %1138 = vmatprep.subr.mxu0 0.0
    %1139 = vmatpush2.msra.mxu0 0.0
    %1140 = vmatprep.subr.mxu0 0.0
    %1141 = vmatpush2.msra.mxu0 0.0
    %1142 = vmatprep.subr.mxu0 0.0
    %1143 = vmatpush2.msra.mxu0 0.0
    %1144 = vmatprep.subr.mxu0 0.0
    %1145 = vmatpush2.msra.mxu0 0.0
    %1146 = vmatprep.subr.mxu0 0.0
    %1147 = vmatpush2.msra.mxu0 0.0
    %1148 = vmatprep.mubr.f32.mxu0 0.0
    %1149 = vmatmul.mubr.f32.gmra.mxu0 %v1008
    %v1150 = vpop.f32.mrf.mxu0
    %v1151 = vadd.f32 %v121, %v1150
    %v1152 = vpop.f32.mrf.mxu0
    %1153 = vdwg.mxu0
    %v1154 = vadd.f32 %v1010, %v1080
    %v1155 = vxor.u32 %v1154, 2147483648
    %v1156 = vmul.f32 %v1155, 1.442695
    %v1157 = vpow.pop %v1156
    %v1158 = vadd.f32 %v1157, 1.0
    %v1159 = vrcp.pop %v1158
    %v1160 = vmul.f32 1.0, %v1159
    %v1161 = vadd.f32 %v1011, %v1082
    %v1162 = vxor.u32 %v1161, 2147483648
    %v1163 = vmul.f32 %v1162, 1.442695
    %v1164 = vpow.pop %v1163
    %v1165 = vadd.f32 %v1164, 1.0
    %v1166 = vrcp.pop %v1165
    %v1167 = vmul.f32 1.0, %v1166
    %v1168 = vmul.f32 %v1160, %v1151
    %v1169 = vadd.f32 %v1012, %v1168
    %v1170 = vtanh.pop %v1169
    %v1171 = vsub.f32 1.0, %v1167
    %v1172 = vmul.f32 %v1171, %v1170
    %v1173 = vmul.f32 %v1167, %v1008
    %v1174 = vadd.f32 %v1172, %v1173
    %s1175 = sadd.s32 %s104, 5
    %v1176 = vstv %s1175
    %vm1177 = vcmp.gt.s32.totalorder %v103, %v1176
    %v1178 = vsel %vm1177, 1, 0
    %1179 = vset.pattern.permute.xlu0 0
    %1180 = vperm.xlu0 %1179, %v1178
    %v1181 = vpop.permute.xlu0 %1180
    %vm1182 = vcmp.eq.s32.totalorder %v1181, 1
    %v1183 = vsel %vm1182, %v1174, 0.0
    %s1184 = scalar_lea.vmem [#allocation7], 40
    %1185 = vst [vmem:[%s1184] sm:$0xff] %v1183
    %v1186 = vsel %vm1182, %v1174, %v1008
    %s1187 = scalar_lea.vmem [#allocation2], 144
    %v1188 = vld [vmem:[%s1187] sm:$0xff]
    %v1189 = vld [vmem:[%s1187 + $0x8] sm:$0xff]
    %v1190 = vld [vmem:[%s1187 + $0x10] sm:$0xff]
    %1191 = vmatprep.subr.mxu0 %v100
    %1192 = vmatpush1.msra.mxu0 %v99
    %1193 = vmatprep.subr.mxu0 %v97
    %1194 = vmatpush1.msra.mxu0 %v96
    %1195 = vmatprep.subr.mxu0 %v94
    %1196 = vmatpush1.msra.mxu0 %v93
    %1197 = vmatprep.subr.mxu0 %v91
    %1198 = vmatpush1.msra.mxu0 %v90
    %1199 = vmatprep.subr.mxu0 %v88
    %1200 = vmatpush1.msra.mxu0 %v87
    %1201 = vmatprep.subr.mxu0 %v85
    %1202 = vmatpush1.msra.mxu0 %v84
    %1203 = vmatprep.subr.mxu0 %v82
    %1204 = vmatpush1.msra.mxu0 %v81
    %1205 = vmatprep.subr.mxu0 %v79
    %1206 = vmatpush1.msra.mxu0 %v78
    %1207 = vmatprep.subr.mxu0 %v76
    %1208 = vmatpush1.msra.mxu0 %v75
    %1209 = vmatprep.subr.mxu0 %v73
    %1210 = vmatpush1.msra.mxu0 %v72
    %1211 = vmatprep.subr.mxu0 %v70
    %1212 = vmatpush1.msra.mxu0 %v69
    %1213 = vmatprep.subr.mxu0 %v67
    %1214 = vmatpush1.msra.mxu0 %v66
    %1215 = vmatprep.subr.mxu0 %v64
    %1216 = vmatpush1.msra.mxu0 %v63
    %1217 = vmatprep.subr.mxu0 %v61
    %1218 = vmatpush1.msra.mxu0 %v60
    %1219 = vmatprep.subr.mxu0 %v58
    %1220 = vmatpush1.msra.mxu0 %v57
    %1221 = vmatprep.subr.mxu0 %v55
    %1222 = vmatpush1.msra.mxu0 %v54
    %1223 = vmatprep.subr.mxu0 0.0
    %1224 = vmatpush2.msra.mxu0 0.0
    %1225 = vmatprep.subr.mxu0 0.0
    %1226 = vmatpush2.msra.mxu0 0.0
    %1227 = vmatprep.subr.mxu0 0.0
    %1228 = vmatpush2.msra.mxu0 0.0
    %1229 = vmatprep.subr.mxu0 0.0
    %1230 = vmatpush2.msra.mxu0 0.0
    %1231 = vmatprep.subr.mxu0 0.0
    %1232 = vmatpush2.msra.mxu0 0.0
    %1233 = vmatprep.subr.mxu0 0.0
    %1234 = vmatpush2.msra.mxu0 0.0
    %1235 = vmatprep.subr.mxu0 0.0
    %1236 = vmatpush2.msra.mxu0 0.0
    %1237 = vmatprep.subr.mxu0 0.0
    %1238 = vmatpush2.msra.mxu0 0.0
    %1239 = vmatprep.subr.mxu0 0.0
    %1240 = vmatpush2.msra.mxu0 0.0
    %1241 = vmatprep.subr.mxu0 0.0
    %1242 = vmatpush2.msra.mxu0 0.0
    %1243 = vmatprep.subr.mxu0 0.0
    %1244 = vmatpush2.msra.mxu0 0.0
    %1245 = vmatprep.subr.mxu0 0.0
    %1246 = vmatpush2.msra.mxu0 0.0
    %1247 = vmatprep.subr.mxu0 0.0
    %1248 = vmatpush2.msra.mxu0 0.0
    %1249 = vmatprep.subr.mxu0 0.0
    %1250 = vmatpush2.msra.mxu0 0.0
    %1251 = vmatprep.subr.mxu0 0.0
    %1252 = vmatpush2.msra.mxu0 0.0
    %1253 = vmatprep.subr.mxu0 0.0
    %1254 = vmatpush2.msra.mxu0 0.0
    %1255 = vmatprep.mubr.f32.mxu0 0.0
    %1256 = vmatmul.mubr.f32.gmra.mxu0 %v1186
    %v1257 = vpop.f32.mrf.mxu0
    %v1258 = vadd.f32 %v113, %v1257
    %v1259 = vpop.f32.mrf.mxu0
    %v1260 = vadd.f32 %v117, %v1259
    %1261 = vdwg.mxu0
    %1262 = vmatprep.subr.mxu0 0.0
    %1263 = vmatpush1.msra.mxu0 %v101
    %1264 = vmatprep.subr.mxu0 0.0
    %1265 = vmatpush1.msra.mxu0 %v98
    %1266 = vmatprep.subr.mxu0 0.0
    %1267 = vmatpush1.msra.mxu0 %v95
    %1268 = vmatprep.subr.mxu0 0.0
    %1269 = vmatpush1.msra.mxu0 %v92
    %1270 = vmatprep.subr.mxu0 0.0
    %1271 = vmatpush1.msra.mxu0 %v89
    %1272 = vmatprep.subr.mxu0 0.0
    %1273 = vmatpush1.msra.mxu0 %v86
    %1274 = vmatprep.subr.mxu0 0.0
    %1275 = vmatpush1.msra.mxu0 %v83
    %1276 = vmatprep.subr.mxu0 0.0
    %1277 = vmatpush1.msra.mxu0 %v80
    %1278 = vmatprep.subr.mxu0 0.0
    %1279 = vmatpush1.msra.mxu0 %v77
    %1280 = vmatprep.subr.mxu0 0.0
    %1281 = vmatpush1.msra.mxu0 %v74
    %1282 = vmatprep.subr.mxu0 0.0
    %1283 = vmatpush1.msra.mxu0 %v71
    %1284 = vmatprep.subr.mxu0 0.0
    %1285 = vmatpush1.msra.mxu0 %v68
    %1286 = vmatprep.subr.mxu0 0.0
    %1287 = vmatpush1.msra.mxu0 %v65
    %1288 = vmatprep.subr.mxu0 0.0
    %1289 = vmatpush1.msra.mxu0 %v62
    %1290 = vmatprep.subr.mxu0 0.0
    %1291 = vmatpush1.msra.mxu0 %v59
    %1292 = vmatprep.subr.mxu0 0.0
    %1293 = vmatpush1.msra.mxu0 %v56
    %1294 = vmatprep.subr.mxu0 0.0
    %1295 = vmatpush2.msra.mxu0 0.0
    %1296 = vmatprep.subr.mxu0 0.0
    %1297 = vmatpush2.msra.mxu0 0.0
    %1298 = vmatprep.subr.mxu0 0.0
    %1299 = vmatpush2.msra.mxu0 0.0
    %1300 = vmatprep.subr.mxu0 0.0
    %1301 = vmatpush2.msra.mxu0 0.0
    %1302 = vmatprep.subr.mxu0 0.0
    %1303 = vmatpush2.msra.mxu0 0.0
    %1304 = vmatprep.subr.mxu0 0.0
    %1305 = vmatpush2.msra.mxu0 0.0
    %1306 = vmatprep.subr.mxu0 0.0
    %1307 = vmatpush2.msra.mxu0 0.0
    %1308 = vmatprep.subr.mxu0 0.0
    %1309 = vmatpush2.msra.mxu0 0.0
    %1310 = vmatprep.subr.mxu0 0.0
    %1311 = vmatpush2.msra.mxu0 0.0
    %1312 = vmatprep.subr.mxu0 0.0
    %1313 = vmatpush2.msra.mxu0 0.0
    %1314 = vmatprep.subr.mxu0 0.0
    %1315 = vmatpush2.msra.mxu0 0.0
    %1316 = vmatprep.subr.mxu0 0.0
    %1317 = vmatpush2.msra.mxu0 0.0
    %1318 = vmatprep.subr.mxu0 0.0
    %1319 = vmatpush2.msra.mxu0 0.0
    %1320 = vmatprep.subr.mxu0 0.0
    %1321 = vmatpush2.msra.mxu0 0.0
    %1322 = vmatprep.subr.mxu0 0.0
    %1323 = vmatpush2.msra.mxu0 0.0
    %1324 = vmatprep.subr.mxu0 0.0
    %1325 = vmatpush2.msra.mxu0 0.0
    %1326 = vmatprep.mubr.f32.mxu0 0.0
    %1327 = vmatmul.mubr.f32.gmra.mxu0 %v1186
    %v1328 = vpop.f32.mrf.mxu0
    %v1329 = vadd.f32 %v121, %v1328
    %v1330 = vpop.f32.mrf.mxu0
    %1331 = vdwg.mxu0
    %v1332 = vadd.f32 %v1188, %v1258
    %v1333 = vxor.u32 %v1332, 2147483648
    %v1334 = vmul.f32 %v1333, 1.442695
    %v1335 = vpow.pop %v1334
    %v1336 = vadd.f32 %v1335, 1.0
    %v1337 = vrcp.pop %v1336
    %v1338 = vmul.f32 1.0, %v1337
    %v1339 = vadd.f32 %v1189, %v1260
    %v1340 = vxor.u32 %v1339, 2147483648
    %v1341 = vmul.f32 %v1340, 1.442695
    %v1342 = vpow.pop %v1341
    %v1343 = vadd.f32 %v1342, 1.0
    %v1344 = vrcp.pop %v1343
    %v1345 = vmul.f32 1.0, %v1344
    %v1346 = vmul.f32 %v1338, %v1329
    %v1347 = vadd.f32 %v1190, %v1346
    %v1348 = vtanh.pop %v1347
    %v1349 = vsub.f32 1.0, %v1345
    %v1350 = vmul.f32 %v1349, %v1348
    %v1351 = vmul.f32 %v1345, %v1186
    %v1352 = vadd.f32 %v1350, %v1351
    %s1353 = sadd.s32 %s104, 6
    %v1354 = vstv %s1353
    %vm1355 = vcmp.gt.s32.totalorder %v103, %v1354
    %v1356 = vsel %vm1355, 1, 0
    %1357 = vset.pattern.permute.xlu0 0
    %1358 = vperm.xlu0 %1357, %v1356
    %v1359 = vpop.permute.xlu0 %1358
    %vm1360 = vcmp.eq.s32.totalorder %v1359, 1
    %v1361 = vsel %vm1360, %v1352, 0.0
    %s1362 = scalar_lea.vmem [#allocation7], 48
    %1363 = vst [vmem:[%s1362] sm:$0xff] %v1361
    %v1364 = vsel %vm1360, %v1352, %v1186
    %s1365 = scalar_lea.vmem [#allocation2], 168
    %v1366 = vld [vmem:[%s1365] sm:$0xff]
    %v1367 = vld [vmem:[%s1365 + $0x8] sm:$0xff]
    %v1368 = vld [vmem:[%s1365 + $0x10] sm:$0xff]
    %1369 = vmatprep.subr.mxu0 %v100
    %1370 = vmatpush1.msra.mxu0 %v99
    %1371 = vmatprep.subr.mxu0 %v97
    %1372 = vmatpush1.msra.mxu0 %v96
    %1373 = vmatprep.subr.mxu0 %v94
    %1374 = vmatpush1.msra.mxu0 %v93
    %1375 = vmatprep.subr.mxu0 %v91
    %1376 = vmatpush1.msra.mxu0 %v90
    %1377 = vmatprep.subr.mxu0 %v88
    %1378 = vmatpush1.msra.mxu0 %v87
    %1379 = vmatprep.subr.mxu0 %v85
    %1380 = vmatpush1.msra.mxu0 %v84
    %1381 = vmatprep.subr.mxu0 %v82
    %1382 = vmatpush1.msra.mxu0 %v81
    %1383 = vmatprep.subr.mxu0 %v79
    %1384 = vmatpush1.msra.mxu0 %v78
    %1385 = vmatprep.subr.mxu0 %v76
    %1386 = vmatpush1.msra.mxu0 %v75
    %1387 = vmatprep.subr.mxu0 %v73
    %1388 = vmatpush1.msra.mxu0 %v72
    %1389 = vmatprep.subr.mxu0 %v70
    %1390 = vmatpush1.msra.mxu0 %v69
    %1391 = vmatprep.subr.mxu0 %v67
    %1392 = vmatpush1.msra.mxu0 %v66
    %1393 = vmatprep.subr.mxu0 %v64
    %1394 = vmatpush1.msra.mxu0 %v63
    %1395 = vmatprep.subr.mxu0 %v61
    %1396 = vmatpush1.msra.mxu0 %v60
    %1397 = vmatprep.subr.mxu0 %v58
    %1398 = vmatpush1.msra.mxu0 %v57
    %1399 = vmatprep.subr.mxu0 %v55
    %1400 = vmatpush1.msra.mxu0 %v54
    %1401 = vmatprep.subr.mxu0 0.0
    %1402 = vmatpush2.msra.mxu0 0.0
    %1403 = vmatprep.subr.mxu0 0.0
    %1404 = vmatpush2.msra.mxu0 0.0
    %1405 = vmatprep.subr.mxu0 0.0
    %1406 = vmatpush2.msra.mxu0 0.0
    %1407 = vmatprep.subr.mxu0 0.0
    %1408 = vmatpush2.msra.mxu0 0.0
    %1409 = vmatprep.subr.mxu0 0.0
    %1410 = vmatpush2.msra.mxu0 0.0
    %1411 = vmatprep.subr.mxu0 0.0
    %1412 = vmatpush2.msra.mxu0 0.0
    %1413 = vmatprep.subr.mxu0 0.0
    %1414 = vmatpush2.msra.mxu0 0.0
    %1415 = vmatprep.subr.mxu0 0.0
    %1416 = vmatpush2.msra.mxu0 0.0
    %1417 = vmatprep.subr.mxu0 0.0
    %1418 = vmatpush2.msra.mxu0 0.0
    %1419 = vmatprep.subr.mxu0 0.0
    %1420 = vmatpush2.msra.mxu0 0.0
    %1421 = vmatprep.subr.mxu0 0.0
    %1422 = vmatpush2.msra.mxu0 0.0
    %1423 = vmatprep.subr.mxu0 0.0
    %1424 = vmatpush2.msra.mxu0 0.0
    %1425 = vmatprep.subr.mxu0 0.0
    %1426 = vmatpush2.msra.mxu0 0.0
    %1427 = vmatprep.subr.mxu0 0.0
    %1428 = vmatpush2.msra.mxu0 0.0
    %1429 = vmatprep.subr.mxu0 0.0
    %1430 = vmatpush2.msra.mxu0 0.0
    %1431 = vmatprep.subr.mxu0 0.0
    %1432 = vmatpush2.msra.mxu0 0.0
    %1433 = vmatprep.mubr.f32.mxu0 0.0
    %1434 = vmatmul.mubr.f32.gmra.mxu0 %v1364
    %v1435 = vpop.f32.mrf.mxu0
    %v1436 = vadd.f32 %v113, %v1435
    %v1437 = vpop.f32.mrf.mxu0
    %v1438 = vadd.f32 %v117, %v1437
    %1439 = vdwg.mxu0
    %1440 = vmatprep.subr.mxu0 0.0
    %1441 = vmatpush1.msra.mxu0 %v101
    %1442 = vmatprep.subr.mxu0 0.0
    %1443 = vmatpush1.msra.mxu0 %v98
    %1444 = vmatprep.subr.mxu0 0.0
    %1445 = vmatpush1.msra.mxu0 %v95
    %1446 = vmatprep.subr.mxu0 0.0
    %1447 = vmatpush1.msra.mxu0 %v92
    %1448 = vmatprep.subr.mxu0 0.0
    %1449 = vmatpush1.msra.mxu0 %v89
    %1450 = vmatprep.subr.mxu0 0.0
    %1451 = vmatpush1.msra.mxu0 %v86
    %1452 = vmatprep.subr.mxu0 0.0
    %1453 = vmatpush1.msra.mxu0 %v83
    %1454 = vmatprep.subr.mxu0 0.0
    %1455 = vmatpush1.msra.mxu0 %v80
    %1456 = vmatprep.subr.mxu0 0.0
    %1457 = vmatpush1.msra.mxu0 %v77
    %1458 = vmatprep.subr.mxu0 0.0
    %1459 = vmatpush1.msra.mxu0 %v74
    %1460 = vmatprep.subr.mxu0 0.0
    %1461 = vmatpush1.msra.mxu0 %v71
    %1462 = vmatprep.subr.mxu0 0.0
    %1463 = vmatpush1.msra.mxu0 %v68
    %1464 = vmatprep.subr.mxu0 0.0
    %1465 = vmatpush1.msra.mxu0 %v65
    %1466 = vmatprep.subr.mxu0 0.0
    %1467 = vmatpush1.msra.mxu0 %v62
    %1468 = vmatprep.subr.mxu0 0.0
    %1469 = vmatpush1.msra.mxu0 %v59
    %1470 = vmatprep.subr.mxu0 0.0
    %1471 = vmatpush1.msra.mxu0 %v56
    %1472 = vmatprep.subr.mxu0 0.0
    %1473 = vmatpush2.msra.mxu0 0.0
    %1474 = vmatprep.subr.mxu0 0.0
    %1475 = vmatpush2.msra.mxu0 0.0
    %1476 = vmatprep.subr.mxu0 0.0
    %1477 = vmatpush2.msra.mxu0 0.0
    %1478 = vmatprep.subr.mxu0 0.0
    %1479 = vmatpush2.msra.mxu0 0.0
    %1480 = vmatprep.subr.mxu0 0.0
    %1481 = vmatpush2.msra.mxu0 0.0
    %1482 = vmatprep.subr.mxu0 0.0
    %1483 = vmatpush2.msra.mxu0 0.0
    %1484 = vmatprep.subr.mxu0 0.0
    %1485 = vmatpush2.msra.mxu0 0.0
    %1486 = vmatprep.subr.mxu0 0.0
    %1487 = vmatpush2.msra.mxu0 0.0
    %1488 = vmatprep.subr.mxu0 0.0
    %1489 = vmatpush2.msra.mxu0 0.0
    %1490 = vmatprep.subr.mxu0 0.0
    %1491 = vmatpush2.msra.mxu0 0.0
    %1492 = vmatprep.subr.mxu0 0.0
    %1493 = vmatpush2.msra.mxu0 0.0
    %1494 = vmatprep.subr.mxu0 0.0
    %1495 = vmatpush2.msra.mxu0 0.0
    %1496 = vmatprep.subr.mxu0 0.0
    %1497 = vmatpush2.msra.mxu0 0.0
    %1498 = vmatprep.subr.mxu0 0.0
    %1499 = vmatpush2.msra.mxu0 0.0
    %1500 = vmatprep.subr.mxu0 0.0
    %1501 = vmatpush2.msra.mxu0 0.0
    %1502 = vmatprep.subr.mxu0 0.0
    %1503 = vmatpush2.msra.mxu0 0.0
    %1504 = vmatprep.mubr.f32.mxu0 0.0
    %1505 = vmatmul.mubr.f32.gmra.mxu0 %v1364
    %v1506 = vpop.f32.mrf.mxu0
    %v1507 = vadd.f32 %v121, %v1506
    %v1508 = vpop.f32.mrf.mxu0
    %1509 = vdwg.mxu0
    %v1510 = vadd.f32 %v1366, %v1436
    %v1511 = vxor.u32 %v1510, 2147483648
    %v1512 = vmul.f32 %v1511, 1.442695
    %v1513 = vpow.pop %v1512
    %v1514 = vadd.f32 %v1513, 1.0
    %v1515 = vrcp.pop %v1514
    %v1516 = vmul.f32 1.0, %v1515
    %v1517 = vadd.f32 %v1367, %v1438
    %v1518 = vxor.u32 %v1517, 2147483648
    %v1519 = vmul.f32 %v1518, 1.442695
    %v1520 = vpow.pop %v1519
    %v1521 = vadd.f32 %v1520, 1.0
    %v1522 = vrcp.pop %v1521
    %v1523 = vmul.f32 1.0, %v1522
    %v1524 = vmul.f32 %v1516, %v1507
    %v1525 = vadd.f32 %v1368, %v1524
    %v1526 = vtanh.pop %v1525
    %v1527 = vsub.f32 1.0, %v1523
    %v1528 = vmul.f32 %v1527, %v1526
    %v1529 = vmul.f32 %v1523, %v1364
    %v1530 = vadd.f32 %v1528, %v1529
    %s1531 = sadd.s32 %s104, 7
    %v1532 = vstv %s1531
    %vm1533 = vcmp.gt.s32.totalorder %v103, %v1532
    %v1534 = vsel %vm1533, 1, 0
    %1535 = vset.pattern.permute.xlu0 0
    %1536 = vperm.xlu0 %1535, %v1534
    %v1537 = vpop.permute.xlu0 %1536
    %vm1538 = vcmp.eq.s32.totalorder %v1537, 1
    %v1539 = vsel %vm1538, %v1530, 0.0
    %s1540 = scalar_lea.vmem [#allocation7], 56
    %1541 = vst [vmem:[%s1540] sm:$0xff] %v1539
    %v1542 = vsel %vm1538, %v1530, %v1364
    %1543 = vst [vmem:[#allocation8] sm:$0xff] %v1542
    // Predicated region
    $region30: #{tpu_custom_call.1} parent=1 // pred_check
      _
    $region31: #{tpu_custom_call.1} parent=1 // pred_check_branch
      %1545 = sbr.rel (0) target = $region33
    $region32: #{tpu_custom_call.1} parent=1 // pred_region
      %s1547 = ssub.s32 1024, 1024
      %1548 = vsyncadd [#allocation4], %s1547
      %s1549 = sshll.u32 [#allocation7], 4
      %s1550 = int_to_ptr.vmem [resolvable:$true] %s1549
      %1555 = dma.vmem_to_hbm [thread:$0]  %s1550, 1024, %s4, [#allocation4], 128, 128, 8
    $region33: #{tpu_custom_call.1} parent=1 // pred_fallthru
      _
    // Predicated region
    $region34: #{tpu_custom_call.1} parent=1 // pred_check
      _
    $region35: #{tpu_custom_call.1} parent=1 // pred_check_branch
      %1557 = sbr.rel (0) target = $region37
    $region36: #{tpu_custom_call.1} parent=1 // pred_region
      %s1559 = ssub.s32 128, 128
      %1560 = vsyncadd [#allocation9], %s1559
      %s1562 = sshll.u32 [#allocation8], 4
      %s1563 = int_to_ptr.vmem [resolvable:$true] %s1562
      %1565 = dma.vmem_to_hbm [thread:$0]  %s1563, 128, %s5, [#allocation9]
    $region37: #{tpu_custom_call.1} parent=1 // pred_fallthru
      _
    // Predicated region
    $region38: #{tpu_custom_call.1} parent=1 // pred_check
      _
    $region39: #{tpu_custom_call.1} parent=1 // pred_check_branch
      %1567 = sbr.rel (0) target = $region41
    $region40: #{tpu_custom_call.1} parent=1 // pred_region
      %1568 = dma.done [#allocation4], 1024
    $region41: #{tpu_custom_call.1} parent=1 // pred_fallthru
      _
    // Predicated region
    $region42: #{tpu_custom_call.1} parent=1 // pred_check
      _
    $region43: #{tpu_custom_call.1} parent=1 // pred_check_branch
      %1570 = sbr.rel (0) target = $region45
    $region44: #{tpu_custom_call.1} parent=1 // pred_region
      %1571 = dma.done [#allocation9], 128
    $region45: #{tpu_custom_call.1} parent=1 // pred_fallthru
      _
    %1572 = vsyncpa [#allocation3], 1
    %1573 = vsyncpa [#allocation6], 1
    %1574 = vsyncpa [#allocation4], 1
    %1575 = vsyncpa [#allocation9], 1

</llo_original>
